<compile_context>
chip_gen: v7x
topology: tpu7x:2x2x1
jax: 0.10.0
libtpu: 0.0.40
codegen_flags: <defaults>
</compile_context>

<pallas_src>
import functools

import jax
import jax.numpy as jnp
from jax.experimental import pallas as pl
from jax.experimental.pallas import tpu as pltpu

LANE = 128
BN_EPS = 1e-5


def _round_up(x, m):
    return ((x + m - 1) // m) * m


def _pad2(a, rows, cols):
    r, c = a.shape
    return jnp.pad(a, ((0, rows - r), (0, cols - c)))


# ----------------------------------------------------------------------------
# Layer 1:  h1 = Â @ X @ W1 + b1     (+ per-row-tile BatchNorm partial sums)
# ----------------------------------------------------------------------------
def _gcn_layer1_kernel(adj_ref, x_ref, w1_ref, b1_ref,
                       h1_ref, sum_ref, sq_ref, acc_ref, *, blk_m, n_true):
    # All grid queries at top level (never inside pl.when bodies).
    i = pl.program_id(0)
    k = pl.program_id(1)
    nk = pl.num_programs(1)
    row_base = i * blk_m

    @pl.when(k == 0)
    def _():
        acc_ref[...] = jnp.zeros_like(acc_ref)

    # acc += Â[i, k] @ X[k]   (bf16 MXU operands, f32 accumulation)
    acc_ref[...] += jnp.dot(adj_ref[...], x_ref[...],
                            preferred_element_type=jnp.float32)

    @pl.when(k == nk - 1)
    def _():
        # (Â X) W1 + b1  — small right-multiply, once per row tile.
        h1 = jnp.dot(acc_ref[...].astype(jnp.bfloat16), w1_ref[...],
                     preferred_element_type=jnp.float32) + b1_ref[...]
        # mask padded node rows so BatchNorm statistics only see real nodes
        row = row_base + jax.lax.broadcasted_iota(jnp.int32, h1.shape, 0)
        h1 = jnp.where(row < n_true, h1, 0.0)
        h1_ref[...] = h1.astype(h1_ref.dtype)
        sum_ref[...] = jnp.sum(h1, axis=0, keepdims=True)[None]
        sq_ref[...] = jnp.sum(h1 * h1, axis=0, keepdims=True)[None]


# ----------------------------------------------------------------------------
# Layer 2:  out = tanh( Â @ relu(BN(h1)) @ W2 + b2 )    (BN folded to scale/shift)
# ----------------------------------------------------------------------------
def _gcn_layer2_kernel(adj_ref, h1_ref, scale_ref, shift_ref, w2_ref, b2_ref,
                       out_ref, acc_ref):
    k = pl.program_id(1)
    nk = pl.num_programs(1)

    @pl.when(k == 0)
    def _():
        acc_ref[...] = jnp.zeros_like(acc_ref)

    # BatchNorm (folded) + ReLU on the fly (f32 VPU), then Â tile matmul (bf16 MXU)
    z = jnp.maximum(h1_ref[...].astype(jnp.float32) * scale_ref[...] + shift_ref[...],
                    0.0)
    acc_ref[...] += jnp.dot(adj_ref[...], z.astype(jnp.bfloat16),
                            preferred_element_type=jnp.float32)

    @pl.when(k == nk - 1)
    def _():
        h2 = jnp.dot(acc_ref[...].astype(jnp.bfloat16), w2_ref[...],
                     preferred_element_type=jnp.float32) + b2_ref[...]
        out_ref[...] = jnp.tanh(h2)  # EUP


# ----------------------------------------------------------------------------
# Wrapper
# ----------------------------------------------------------------------------
def irrelevant_learner_forward(params, adj, x, *, blk=128):
    n, d = x.shape
    h = params["w1"].shape[1]
    o = params["w2"].shape[1]

    n_pad = _round_up(n, blk)
    d_pad = _round_up(d, LANE)
    h_pad = _round_up(h, LANE)
    o_pad = _round_up(o, LANE)
    rt = n_pad // blk   # row tiles
    kt = n_pad // blk   # k (column) tiles of Â

    adj_p = _pad2(adj, n_pad, n_pad).astype(jnp.bfloat16)
    x_p = _pad2(x, n_pad, d_pad).astype(jnp.bfloat16)
    w1_p = _pad2(params["w1"], d_pad, h_pad).astype(jnp.bfloat16)
    b1_p = jnp.pad(params["b1"], (0, h_pad - h)).reshape(1, h_pad).astype(jnp.float32)
    gamma_p = jnp.pad(params["gamma"], (0, h_pad - h)).astype(jnp.float32)
    beta_p = jnp.pad(params["beta"], (0, h_pad - h)).astype(jnp.float32)
    w2_p = _pad2(params["w2"], h_pad, o_pad).astype(jnp.bfloat16)
    b2_p = jnp.pad(params["b2"], (0, o_pad - o)).reshape(1, o_pad).astype(jnp.float32)

    cparams = pltpu.CompilerParams(
        dimension_semantics=("parallel", "arbitrary"),
        vmem_limit_bytes=48 * 1024 * 1024,
    )

    # ---- layer 1 ----
    k1 = functools.partial(_gcn_layer1_kernel, blk_m=blk, n_true=n)
    h1_pre, psum, psq = pl.pallas_call(
        k1,
        out_shape=(
            jax.ShapeDtypeStruct((n_pad, h_pad), jnp.bfloat16),
            jax.ShapeDtypeStruct((rt, 1, h_pad), jnp.float32),
            jax.ShapeDtypeStruct((rt, 1, h_pad), jnp.float32),
        ),
        grid_spec=pltpu.PrefetchScalarGridSpec(
            num_scalar_prefetch=0,
            grid=(rt, kt),
            in_specs=[
                pl.BlockSpec((blk, blk), lambda i, k: (i, k)),
                pl.BlockSpec((blk, d_pad), lambda i, k: (k, 0)),
                pl.BlockSpec((d_pad, h_pad), lambda i, k: (0, 0)),
                pl.BlockSpec((1, h_pad), lambda i, k: (0, 0)),
            ],
            out_specs=(
                pl.BlockSpec((blk, h_pad), lambda i, k: (i, 0)),
                pl.BlockSpec((1, 1, h_pad), lambda i, k: (i, 0, 0)),
                pl.BlockSpec((1, 1, h_pad), lambda i, k: (i, 0, 0)),
            ),
            scratch_shapes=[pltpu.VMEM((blk, d_pad), jnp.float32)],
        ),
        compiler_params=cparams,
    )(adj_p, x_p, w1_p, b1_p)

    # ---- BatchNorm1d (training batch stats) finalize: tiny (rt, H) reduction ----
    total = jnp.sum(psum[:, 0, :], axis=0)
    total_sq = jnp.sum(psq[:, 0, :], axis=0)
    mean = total / n
    var = jnp.maximum(total_sq / n - mean * mean, 0.0)   # biased batch variance
    inv_std = jax.lax.rsqrt(var + BN_EPS)
    scale = (gamma_p * inv_std).reshape(1, h_pad)
    shift = (beta_p - mean * gamma_p * inv_std).reshape(1, h_pad)

    # ---- layer 2 (+ tanh) ----
    out = pl.pallas_call(
        _gcn_layer2_kernel,
        out_shape=jax.ShapeDtypeStruct((n_pad, o_pad), jnp.float32),
        grid_spec=pltpu.PrefetchScalarGridSpec(
            num_scalar_prefetch=0,
            grid=(rt, kt),
            in_specs=[
                pl.BlockSpec((blk, blk), lambda i, k: (i, k)),
                pl.BlockSpec((blk, h_pad), lambda i, k: (k, 0)),
                pl.BlockSpec((1, h_pad), lambda i, k: (0, 0)),
                pl.BlockSpec((1, h_pad), lambda i, k: (0, 0)),
                pl.BlockSpec((h_pad, o_pad), lambda i, k: (0, 0)),
                pl.BlockSpec((1, o_pad), lambda i, k: (0, 0)),
            ],
            out_specs=pl.BlockSpec((blk, o_pad), lambda i, k: (i, 0)),
            scratch_shapes=[pltpu.VMEM((blk, h_pad), jnp.float32)],
        ),
        compiler_params=cparams,
    )(adj_p, h1_pre, scale, shift, w2_p, b2_p)

    return out[:n, :o]


# ----------------------------------------------------------------------------
# Glue: normalized adjacency, parameters, f32 reference
# ----------------------------------------------------------------------------
def build_norm_adj(edge_index, n):
    src, dst = edge_index
    a = jnp.zeros((n, n), jnp.float32).at[src, dst].set(1.0)
    a = jnp.maximum(a, a.T)                      # symmetrize
    a = a + jnp.eye(n, dtype=jnp.float32)        # self loops
    deg = jnp.sum(a, axis=1)
    dinv = jax.lax.rsqrt(deg)
    return a * dinv[:, None] * dinv[None, :]     # D^-1/2 (A+I) D^-1/2


def init_params(key, d, h, o):
    k1, k2, k3, k4, k5, k6 = jax.random.split(key, 6)
    return {
        "w1": jax.random.normal(k1, (d, h), jnp.float32) * 0.1,
        "b1": jax.random.normal(k2, (h,), jnp.float32) * 0.01,
        "gamma": 1.0 + 0.1 * jax.random.normal(k5, (h,), jnp.float32),
        "beta": 0.05 * jax.random.normal(k6, (h,), jnp.float32),
        "w2": jax.random.normal(k3, (h, o), jnp.float32) * 0.1,
        "b2": jax.random.normal(k4, (o,), jnp.float32) * 0.01,
    }


def reference_forward(params, adj, x):
    h = adj @ (x @ params["w1"]) + params["b1"]
    mu = jnp.mean(h, axis=0)
    var = jnp.mean((h - mu) ** 2, axis=0)
    h = (h - mu) * jax.lax.rsqrt(var + BN_EPS) * params["gamma"] + params["beta"]
    h = jnp.maximum(h, 0.0)
    out = adj @ (h @ params["w2"]) + params["b2"]
    return jnp.tanh(out)


if __name__ == "__main__":
    # N deliberately not a multiple of the 128-row tile -> exercises the row masking.
    N, D, H, O = 500, 96, 64, 32

    key = jax.random.PRNGKey(0)
    kx, kp = jax.random.split(key)
    x = jax.random.normal(kx, (N, D), jnp.float32)
    src = jnp.arange(N, dtype=jnp.int32)
    dst = (src + 1) % N
    edge_index = jnp.stack([src, dst], axis=0)   # ring graph

    adj = build_norm_adj(edge_index, N)
    params = init_params(kp, D, H, O)

    fwd = jax.jit(functools.partial(irrelevant_learner_forward, blk=128))
    out = fwd(params, adj, x)
    jax.block_until_ready(out)

    ref = reference_forward(params, adj, x)
    err = float(jnp.max(jnp.abs(out - ref)))

    assert out.shape == (N, O)
    assert bool(jnp.all(jnp.isfinite(out)))
    assert err < 0.1, f"max abs error vs f32 reference too large: {err}"
    print("KERNEL_OK")
</pallas_src>

<mosaic_0001>
module attributes {stable_mosaic.version = 11 : i64} {
  func.func @_gcn_layer1_kernel(%arg0: i32, %arg1: i32, %arg2: memref<128x128xbf16, #tpu.memory_space<vmem>>, %arg3: memref<128x128xbf16, #tpu.memory_space<vmem>>, %arg4: memref<128x128xbf16, #tpu.memory_space<vmem>>, %arg5: memref<1x128xf32, #tpu.memory_space<vmem>>, %arg6: memref<128x128xbf16, #tpu.memory_space<vmem>>, %arg7: memref<1x1x128xf32, #tpu.memory_space<vmem>>, %arg8: memref<1x1x128xf32, #tpu.memory_space<vmem>>, %arg9: memref<128x128xf32, #tpu.memory_space<vmem>>) attributes {dimension_semantics = [#tpu.dimension_semantics<parallel>, #tpu.dimension_semantics<arbitrary>], iteration_bounds = array<i64: 4, 4>, scalar_prefetch = 0 : i64, scratch_operands = 1 : i64, tpu.core_type = #tpu.core_type<tc>, window_params = [{transform_indices = @transform_0, window_bounds = array<i64: 128, 128>}, {transform_indices = @transform_1, window_bounds = array<i64: 128, 128>}, {pipeline_mode = #tpu.pipeline_mode<synchronous>, transform_indices = @transform_2, window_bounds = array<i64: 128, 128>}, {pipeline_mode = #tpu.pipeline_mode<synchronous>, transform_indices = @transform_3, window_bounds = array<i64: 1, 128>}, {transform_indices = @transform_4, window_bounds = array<i64: 128, 128>}, {transform_indices = @transform_5, window_bounds = array<i64: 1, 1, 128>}, {transform_indices = @transform_6, window_bounds = array<i64: 1, 1, 128>}]} {
    %c128_i32 = arith.constant 128 : i32
    %0 = arith.muli %arg0, %c128_i32 : i32
    %c0_i32 = arith.constant 0 : i32
    %1 = arith.cmpi eq, %arg1, %c0_i32 : i32
    %2 = arith.extui %1 : i1 to i32
    %c0_i32_0 = arith.constant 0 : i32
    %3 = arith.cmpi ne, %2, %c0_i32_0 : i32
    scf.if %3 {
      %cst_9 = arith.constant 0.000000e+00 : f32
      %13 = vector.broadcast %cst_9 : f32 to vector<128x128xf32>
      %c0_10 = arith.constant 0 : index
      %c0_11 = arith.constant 0 : index
      %14 = vector.load %arg9[%c0_10, %c0_11] : memref<128x128xf32, #tpu.memory_space<vmem>>, vector<128x128xf32>
      tpu.vector_store %arg9[%c0_10, %c0_11], %13 {strides = array<i32>} : memref<128x128xf32, #tpu.memory_space<vmem>>, vector<128x128xf32>,
    } else {
    }
    %c0 = arith.constant 0 : index
    %c0_1 = arith.constant 0 : index
    %4 = vector.load %arg9[%c0, %c0_1] : memref<128x128xf32, #tpu.memory_space<vmem>>, vector<128x128xf32>
    %c0_2 = arith.constant 0 : index
    %c0_3 = arith.constant 0 : index
    %5 = vector.load %arg2[%c0_2, %c0_3] : memref<128x128xbf16, #tpu.memory_space<vmem>>, vector<128x128xbf16>
    %c0_4 = arith.constant 0 : index
    %c0_5 = arith.constant 0 : index
    %6 = vector.load %arg3[%c0_4, %c0_5] : memref<128x128xbf16, #tpu.memory_space<vmem>>, vector<128x128xbf16>
    %cst = arith.constant dense<0.000000e+00> : vector<128x128xf32>
    %7 = tpu.matmul %5, %6, %cst {dimension_numbers = #tpu.dot_dimension_numbers<[1], [0], [0], [1], [0, 0, 1, 1], [], []>} : vector<128x128xbf16>, vector<128x128xbf16>, vector<128x128xf32> -> vector<128x128xf32>
    %8 = arith.addf %4, %7 : vector<128x128xf32>
    %c0_6 = arith.constant 0 : index
    %c0_7 = arith.constant 0 : index
    %9 = vector.load %arg9[%c0_6, %c0_7] : memref<128x128xf32, #tpu.memory_space<vmem>>, vector<128x128xf32>
    tpu.vector_store %arg9[%c0_6, %c0_7], %8 {strides = array<i32>} : memref<128x128xf32, #tpu.memory_space<vmem>>, vector<128x128xf32>,
    %c3_i32 = arith.constant 3 : i32
    %10 = arith.cmpi eq, %arg1, %c3_i32 : i32
    %11 = arith.extui %10 : i1 to i32
    %c0_i32_8 = arith.constant 0 : i32
    %12 = arith.cmpi ne, %11, %c0_i32_8 : i32
    scf.if %12 {
      %c0_9 = arith.constant 0 : index
      %c0_10 = arith.constant 0 : index
      %13 = vector.load %arg9[%c0_9, %c0_10] : memref<128x128xf32, #tpu.memory_space<vmem>>, vector<128x128xf32>
      %14 = arith.truncf %13 : vector<128x128xf32> to vector<128x128xbf16>
      %c0_11 = arith.constant 0 : index
      %c0_12 = arith.constant 0 : index
      %15 = vector.load %arg4[%c0_11, %c0_12] : memref<128x128xbf16, #tpu.memory_space<vmem>>, vector<128x128xbf16>
      %cst_13 = arith.constant dense<0.000000e+00> : vector<128x128xf32>
      %16 = tpu.matmul %14, %15, %cst_13 {dimension_numbers = #tpu.dot_dimension_numbers<[1], [0], [0], [1], [0, 0, 1, 1], [], []>} : vector<128x128xbf16>, vector<128x128xbf16>, vector<128x128xf32> -> vector<128x128xf32>
      %c0_14 = arith.constant 0 : index
      %c0_15 = arith.constant 0 : index
      %17 = vector.load %arg5[%c0_14, %c0_15] : memref<1x128xf32, #tpu.memory_space<vmem>>, vector<1x128xf32>
      %18 = vector.broadcast %17 : vector<1x128xf32> to vector<128x128xf32>
      %19 = arith.addf %16, %18 : vector<128x128xf32>
      %20 = tpu.iota {dimensions = array<i32: 0>} : vector<128x128xi32>
      %21 = vector.broadcast %0 : i32 to vector<128x128xi32>
      %22 = arith.addi %21, %20 : vector<128x128xi32>
      %c500_i32 = arith.constant 500 : i32
      %23 = vector.broadcast %c500_i32 : i32 to vector<128x128xi32>
      %24 = arith.cmpi slt, %22, %23 : vector<128x128xi32>
      %cst_16 = arith.constant 0.000000e+00 : f32
      %25 = vector.broadcast %cst_16 : f32 to vector<128x128xf32>
      %26 = arith.select %24, %19, %25 : vector<128x128xi1>, vector<128x128xf32>
      %27 = arith.truncf %26 : vector<128x128xf32> to vector<128x128xbf16>
      %c0_17 = arith.constant 0 : index
      %c0_18 = arith.constant 0 : index
      %28 = vector.load %arg6[%c0_17, %c0_18] : memref<128x128xbf16, #tpu.memory_space<vmem>>, vector<128x128xbf16>
      tpu.vector_store %arg6[%c0_17, %c0_18], %27 {strides = array<i32>} : memref<128x128xbf16, #tpu.memory_space<vmem>>, vector<128x128xbf16>,
      %cst_19 = arith.constant dense<0.000000e+00> : vector<128xf32>
      %29 = vector.multi_reduction <add>, %26, %cst_19 [0] : vector<128x128xf32> to vector<128xf32>
      %30 = vector.shape_cast %29 : vector<128xf32> to vector<1x128xf32>
      %31 = vector.shape_cast %30 : vector<1x128xf32> to vector<1x1x128xf32>
      %c0_20 = arith.constant 0 : index
      %c0_21 = arith.constant 0 : index
      %c0_22 = arith.constant 0 : index
      %32 = vector.load %arg7[%c0_20, %c0_21, %c0_22] : memref<1x1x128xf32, #tpu.memory_space<vmem>>, vector<1x1x128xf32>
      tpu.vector_store %arg7[%c0_20, %c0_21, %c0_22], %31 {strides = array<i32>} : memref<1x1x128xf32, #tpu.memory_space<vmem>>, vector<1x1x128xf32>,
      %33 = arith.mulf %26, %26 : vector<128x128xf32>
      %cst_23 = arith.constant dense<0.000000e+00> : vector<128xf32>
      %34 = vector.multi_reduction <add>, %33, %cst_23 [0] : vector<128x128xf32> to vector<128xf32>
      %35 = vector.shape_cast %34 : vector<128xf32> to vector<1x128xf32>
      %36 = vector.shape_cast %35 : vector<1x128xf32> to vector<1x1x128xf32>
      %c0_24 = arith.constant 0 : index
      %c0_25 = arith.constant 0 : index
      %c0_26 = arith.constant 0 : index
      %37 = vector.load %arg8[%c0_24, %c0_25, %c0_26] : memref<1x1x128xf32, #tpu.memory_space<vmem>>, vector<1x1x128xf32>
      tpu.vector_store %arg8[%c0_24, %c0_25, %c0_26], %36 {strides = array<i32>} : memref<1x1x128xf32, #tpu.memory_space<vmem>>, vector<1x1x128xf32>,
    } else {
    }
    return
  }
  func.func @transform_0(%arg0: i32, %arg1: i32) -> (i32, i32) {
    %c0_i32 = arith.constant 0 : i32
    return %arg0, %arg1 : i32, i32
  }
  func.func @transform_1(%arg0: i32, %arg1: i32) -> (i32, i32) {
    %c0_i32 = arith.constant 0 : i32
    %c0_i32_0 = arith.constant 0 : i32
    return %arg1, %c0_i32 : i32, i32
  }
  func.func @transform_2(%arg0: i32, %arg1: i32) -> (i32, i32) {
    %c0_i32 = arith.constant 0 : i32
    %c0_i32_0 = arith.constant 0 : i32
    %c0_i32_1 = arith.constant 0 : i32
    return %c0_i32, %c0_i32_0 : i32, i32
  }
  func.func @transform_3(%arg0: i32, %arg1: i32) -> (i32, i32) {
    %c0_i32 = arith.constant 0 : i32
    %c0_i32_0 = arith.constant 0 : i32
    %c0_i32_1 = arith.constant 0 : i32
    return %c0_i32, %c0_i32_0 : i32, i32
  }
  func.func @transform_4(%arg0: i32, %arg1: i32) -> (i32, i32) {
    %c0_i32 = arith.constant 0 : i32
    %c0_i32_0 = arith.constant 0 : i32
    return %arg0, %c0_i32 : i32, i32
  }
  func.func @transform_5(%arg0: i32, %arg1: i32) -> (i32, i32, i32) {
    %c0_i32 = arith.constant 0 : i32
    %c0_i32_0 = arith.constant 0 : i32
    %c0_i32_1 = arith.constant 0 : i32
    return %arg0, %c0_i32, %c0_i32_0 : i32, i32, i32
  }
  func.func @transform_6(%arg0: i32, %arg1: i32) -> (i32, i32, i32) {
    %c0_i32 = arith.constant 0 : i32
    %c0_i32_0 = arith.constant 0 : i32
    %c0_i32_1 = arith.constant 0 : i32
    return %arg0, %c0_i32, %c0_i32_0 : i32, i32, i32
  }
}

module attributes {stable_mosaic.version = 11 : i64} {
  func.func @_gcn_layer2_kernel(%arg0: i32, %arg1: i32, %arg2: memref<128x128xbf16, #tpu.memory_space<vmem>>, %arg3: memref<128x128xbf16, #tpu.memory_space<vmem>>, %arg4: memref<1x128xf32, #tpu.memory_space<vmem>>, %arg5: memref<1x128xf32, #tpu.memory_space<vmem>>, %arg6: memref<128x128xbf16, #tpu.memory_space<vmem>>, %arg7: memref<1x128xf32, #tpu.memory_space<vmem>>, %arg8: memref<128x128xf32, #tpu.memory_space<vmem>>, %arg9: memref<128x128xf32, #tpu.memory_space<vmem>>) attributes {dimension_semantics = [#tpu.dimension_semantics<parallel>, #tpu.dimension_semantics<arbitrary>], iteration_bounds = array<i64: 4, 4>, scalar_prefetch = 0 : i64, scratch_operands = 1 : i64, tpu.core_type = #tpu.core_type<tc>, window_params = [{transform_indices = @transform_0, window_bounds = array<i64: 128, 128>}, {transform_indices = @transform_1, window_bounds = array<i64: 128, 128>}, {pipeline_mode = #tpu.pipeline_mode<synchronous>, transform_indices = @transform_2, window_bounds = array<i64: 1, 128>}, {pipeline_mode = #tpu.pipeline_mode<synchronous>, transform_indices = @transform_3, window_bounds = array<i64: 1, 128>}, {pipeline_mode = #tpu.pipeline_mode<synchronous>, transform_indices = @transform_4, window_bounds = array<i64: 128, 128>}, {pipeline_mode = #tpu.pipeline_mode<synchronous>, transform_indices = @transform_5, window_bounds = array<i64: 1, 128>}, {transform_indices = @transform_6, window_bounds = array<i64: 128, 128>}]} {
    %c0_i32 = arith.constant 0 : i32
    %0 = arith.cmpi eq, %arg1, %c0_i32 : i32
    %1 = arith.extui %0 : i1 to i32
    %c0_i32_0 = arith.constant 0 : i32
    %2 = arith.cmpi ne, %1, %c0_i32_0 : i32
    scf.if %2 {
      %cst_14 = arith.constant 0.000000e+00 : f32
      %22 = vector.broadcast %cst_14 : f32 to vector<128x128xf32>
      %c0_15 = arith.constant 0 : index
      %c0_16 = arith.constant 0 : index
      %23 = vector.load %arg9[%c0_15, %c0_16] : memref<128x128xf32, #tpu.memory_space<vmem>>, vector<128x128xf32>
      tpu.vector_store %arg9[%c0_15, %c0_16], %22 {strides = array<i32>} : memref<128x128xf32, #tpu.memory_space<vmem>>, vector<128x128xf32>,
    } else {
    }
    %c0 = arith.constant 0 : index
    %c0_1 = arith.constant 0 : index
    %3 = vector.load %arg3[%c0, %c0_1] : memref<128x128xbf16, #tpu.memory_space<vmem>>, vector<128x128xbf16>
    %4 = arith.extf %3 : vector<128x128xbf16> to vector<128x128xf32>
    %c0_2 = arith.constant 0 : index
    %c0_3 = arith.constant 0 : index
    %5 = vector.load %arg4[%c0_2, %c0_3] : memref<1x128xf32, #tpu.memory_space<vmem>>, vector<1x128xf32>
    %6 = vector.broadcast %5 : vector<1x128xf32> to vector<128x128xf32>
    %7 = arith.mulf %4, %6 : vector<128x128xf32>
    %c0_4 = arith.constant 0 : index
    %c0_5 = arith.constant 0 : index
    %8 = vector.load %arg5[%c0_4, %c0_5] : memref<1x128xf32, #tpu.memory_space<vmem>>, vector<1x128xf32>
    %9 = vector.broadcast %8 : vector<1x128xf32> to vector<128x128xf32>
    %10 = arith.addf %7, %9 : vector<128x128xf32>
    %cst = arith.constant 0.000000e+00 : f32
    %11 = vector.broadcast %cst : f32 to vector<128x128xf32>
    %12 = arith.maximumf %10, %11 : vector<128x128xf32>
    %c0_6 = arith.constant 0 : index
    %c0_7 = arith.constant 0 : index
    %13 = vector.load %arg9[%c0_6, %c0_7] : memref<128x128xf32, #tpu.memory_space<vmem>>, vector<128x128xf32>
    %c0_8 = arith.constant 0 : index
    %c0_9 = arith.constant 0 : index
    %14 = vector.load %arg2[%c0_8, %c0_9] : memref<128x128xbf16, #tpu.memory_space<vmem>>, vector<128x128xbf16>
    %15 = arith.truncf %12 : vector<128x128xf32> to vector<128x128xbf16>
    %cst_10 = arith.constant dense<0.000000e+00> : vector<128x128xf32>
    %16 = tpu.matmul %14, %15, %cst_10 {dimension_numbers = #tpu.dot_dimension_numbers<[1], [0], [0], [1], [0, 0, 1, 1], [], []>} : vector<128x128xbf16>, vector<128x128xbf16>, vector<128x128xf32> -> vector<128x128xf32>
    %17 = arith.addf %13, %16 : vector<128x128xf32>
    %c0_11 = arith.constant 0 : index
    %c0_12 = arith.constant 0 : index
    %18 = vector.load %arg9[%c0_11, %c0_12] : memref<128x128xf32, #tpu.memory_space<vmem>>, vector<128x128xf32>
    tpu.vector_store %arg9[%c0_11, %c0_12], %17 {strides = array<i32>} : memref<128x128xf32, #tpu.memory_space<vmem>>, vector<128x128xf32>,
    %c3_i32 = arith.constant 3 : i32
    %19 = arith.cmpi eq, %arg1, %c3_i32 : i32
    %20 = arith.extui %19 : i1 to i32
    %c0_i32_13 = arith.constant 0 : i32
    %21 = arith.cmpi ne, %20, %c0_i32_13 : i32
    scf.if %21 {
      %c0_14 = arith.constant 0 : index
      %c0_15 = arith.constant 0 : index
      %22 = vector.load %arg9[%c0_14, %c0_15] : memref<128x128xf32, #tpu.memory_space<vmem>>, vector<128x128xf32>
      %23 = arith.truncf %22 : vector<128x128xf32> to vector<128x128xbf16>
      %c0_16 = arith.constant 0 : index
      %c0_17 = arith.constant 0 : index
      %24 = vector.load %arg6[%c0_16, %c0_17] : memref<128x128xbf16, #tpu.memory_space<vmem>>, vector<128x128xbf16>
      %cst_18 = arith.constant dense<0.000000e+00> : vector<128x128xf32>
      %25 = tpu.matmul %23, %24, %cst_18 {dimension_numbers = #tpu.dot_dimension_numbers<[1], [0], [0], [1], [0, 0, 1, 1], [], []>} : vector<128x128xbf16>, vector<128x128xbf16>, vector<128x128xf32> -> vector<128x128xf32>
      %c0_19 = arith.constant 0 : index
      %c0_20 = arith.constant 0 : index
      %26 = vector.load %arg7[%c0_19, %c0_20] : memref<1x128xf32, #tpu.memory_space<vmem>>, vector<1x128xf32>
      %27 = vector.broadcast %26 : vector<1x128xf32> to vector<128x128xf32>
      %28 = arith.addf %25, %27 : vector<128x128xf32>
      %29 = math.tanh %28 : vector<128x128xf32>
      %c0_21 = arith.constant 0 : index
      %c0_22 = arith.constant 0 : index
      %30 = vector.load %arg8[%c0_21, %c0_22] : memref<128x128xf32, #tpu.memory_space<vmem>>, vector<128x128xf32>
      tpu.vector_store %arg8[%c0_21, %c0_22], %29 {strides = array<i32>} : memref<128x128xf32, #tpu.memory_space<vmem>>, vector<128x128xf32>,
    } else {
    }
    return
  }
  func.func @transform_0(%arg0: i32, %arg1: i32) -> (i32, i32) {
    %c0_i32 = arith.constant 0 : i32
    return %arg0, %arg1 : i32, i32
  }
  func.func @transform_1(%arg0: i32, %arg1: i32) -> (i32, i32) {
    %c0_i32 = arith.constant 0 : i32
    %c0_i32_0 = arith.constant 0 : i32
    return %arg1, %c0_i32 : i32, i32
  }
  func.func @transform_2(%arg0: i32, %arg1: i32) -> (i32, i32) {
    %c0_i32 = arith.constant 0 : i32
    %c0_i32_0 = arith.constant 0 : i32
    %c0_i32_1 = arith.constant 0 : i32
    return %c0_i32, %c0_i32_0 : i32, i32
  }
  func.func @transform_3(%arg0: i32, %arg1: i32) -> (i32, i32) {
    %c0_i32 = arith.constant 0 : i32
    %c0_i32_0 = arith.constant 0 : i32
    %c0_i32_1 = arith.constant 0 : i32
    return %c0_i32, %c0_i32_0 : i32, i32
  }
  func.func @transform_4(%arg0: i32, %arg1: i32) -> (i32, i32) {
    %c0_i32 = arith.constant 0 : i32
    %c0_i32_0 = arith.constant 0 : i32
    %c0_i32_1 = arith.constant 0 : i32
    return %c0_i32, %c0_i32_0 : i32, i32
  }
  func.func @transform_5(%arg0: i32, %arg1: i32) -> (i32, i32) {
    %c0_i32 = arith.constant 0 : i32
    %c0_i32_0 = arith.constant 0 : i32
    %c0_i32_1 = arith.constant 0 : i32
    return %c0_i32, %c0_i32_0 : i32, i32
  }
  func.func @transform_6(%arg0: i32, %arg1: i32) -> (i32, i32) {
    %c0_i32 = arith.constant 0 : i32
    %c0_i32_0 = arith.constant 0 : i32
    return %arg0, %c0_i32 : i32, i32
  }
}

</mosaic_0001>

<llo_original>
// kernel: irrelevant_learner_forward.3
$region0: #{irrelevant_learner_forward.3}
  #allocation0 [shape = 'u32[]', space=smem, size = 0x4, offset = 0x4, fixed_abs, tag = 'smem constant byte address 0x4 - core index']
  #allocation1 [shape = 'u32[144,128]{1,0:T(1,128)}', space=vmem, size = 0x12000, scoped, tag = 'internal scratch']
  #allocation2 [shape = 'f32[128,128]{1,0:T(8,128)}', space=vmem, size = 0x10000, scoped, tag = 'scratch operand']
  %s0 = inlined_call_operand.vmem [shape: bf16[512,512], index: 0, kind: input, shape index: {}]
  %s1 = inlined_call_operand.vmem [shape: bf16[512,128], index: 1, kind: input, shape index: {}]
  %s2 = inlined_call_operand.vmem [shape: f32[1,128], index: 2, kind: input, shape index: {}]
  %s3 = inlined_call_operand.vmem [shape: f32[1,128], index: 3, kind: input, shape index: {}]
  %s4 = inlined_call_operand.vmem [shape: bf16[128,128], index: 4, kind: input, shape index: {}]
  %s5 = inlined_call_operand.vmem [shape: f32[1,128], index: 5, kind: input, shape index: {}]
  %s6 = inlined_call_operand.vmem [shape: f32[512,128], index: 6, kind: output, shape index: {}]
  %s7 = sld [smem:[#allocation0]]
  $region106: #{irrelevant_learner_forward.3} parent=0
    _
  %s9 = ssub.s32 1, %s7
  %s10 = scalar_select 0, %s9, %s7
  $region1: #{irrelevant_learner_forward.3} parent=0
    #allocation3 [shape = 'u8[65536]{0}', space=vmem, size = 0x10000, scoped, tag = 'input window, operand 0']
    loop: start=0, step=1, limit=18
    $region2: #{irrelevant_learner_forward.3} parent=1 // loop_pre_header
      _
    $region3: #{irrelevant_learner_forward.3} parent=1 // loop_header
      %s12 = sphi 0, %s16
      %p13 = scmp.ge.s32.totalorder %s12, 18
      %s19 = sphi 0, %s31
      %s20 = sphi 0, %s27
      %s21 = sphi 0, %s19
      %s22 = sphi 0, %s20
      %s23 = sphi 0, %s21
      %s24 = sphi 0, %s22
      %s36 = sphi 0, %s38
      %s39 = sphi 0, %s36
      %s40 = sphi 0, %s39
      %s56 = sphi 0, %s40
      %s62 = sphi 0, %s64
      %s65 = sphi 0, %s62
      %s66 = sphi 0, %s65
      %s82 = sphi 0, %s66
      %s86 = sphi 0, %s86
      %s88 = sphi 0, %s86
      %s89 = sphi 0, %s88
      %s103 = sphi 0, %s89
      %s107 = sphi 0, %s107
      %s109 = sphi 0, %s107
      %s110 = sphi 0, %s109
      %s124 = sphi 0, %s110
      %s128 = sphi 0, %s128
      %s130 = sphi 0, %s128
      %s131 = sphi 0, %s130
      %s145 = sphi 0, %s131
      %s149 = sphi 0, %s149
      %s151 = sphi 0, %s149
      %s152 = sphi 0, %s151
      %s166 = sphi 0, %s152
      %s172 = sphi 0, %s174
      %s175 = sphi 0, %s172
      %s176 = sphi 0, %s175
      %s192 = sphi 0, %s176
    $region4: #{irrelevant_learner_forward.3} parent=1 // loop_header_branch
      %15 = sbr.rel (%p13) target = $region8
    $region5: #{irrelevant_learner_forward.3} parent=1 // loop_body
      %s17 = ssub.s32 %s12, 1
      %s18 = ssub.s32 %s12, 2
      %s25 = sadd.s32 1, %s20
      %p26 = scmp.ge.s32.totalorder %s25, 4
      %s27 = scalar_select %p26, 0, %s25
      %s28 = sadd.s32 1, %s19
      %s29 = scalar_select %p26, %s28, %s19
      %p30 = scmp.ge.s32.totalorder %s29, 4
      %s31 = scalar_select %p30, 0, %s29
      %s32 = ssub.s32 %s19, %s31
      %s33 = ssub.s32 %s20, %s27
      %s34 = sor.u32 %s32, %s33
      %p35 = scmp.eq.s32.totalorder %s34, 0
      %s37 = sadd.s32 %s36, 1
      %s38 = scalar_select %p35, %s36, %s37
      %p41 = pneg %p35
      %p42 = scmp.eq.s32.totalorder %s12, 15
      %p43 = por %p41, %p42
      %p44 = scmp.ne.s32.totalorder %s36, %s39
      %p45 = scmp.eq.s32.totalorder %s12, 0
      %p46 = por %p44, %p45
      %p47 = scmp.ne.s32.totalorder %s36, %s39
      %p48 = scmp.eq.s32.totalorder %s17, 15
      %p49 = por %p47, %p48
      %p50 = scmp.ne.s32.totalorder %s39, %s40
      %p51 = scmp.eq.s32.totalorder %s17, 0
      %p52 = por %p50, %p51
      %p53 = scmp.ne.s32.totalorder %s39, %s40
      %p54 = scmp.eq.s32.totalorder %s18, 15
      %p55 = por %p53, %p54
      %p57 = scmp.ne.s32.totalorder %s40, %s56
      %p58 = scmp.eq.s32.totalorder %s18, 0
      %p59 = por %p57, %p58
      %s60 = ssub.s32 %s20, %s27
      %p61 = scmp.eq.s32.totalorder %s60, 0
      %s63 = sadd.s32 %s62, 1
      %s64 = scalar_select %p61, %s62, %s63
      %p67 = pneg %p61
      %p68 = scmp.eq.s32.totalorder %s12, 15
      %p69 = por %p67, %p68
      %p70 = scmp.ne.s32.totalorder %s62, %s65
      %p71 = scmp.eq.s32.totalorder %s12, 0
      %p72 = por %p70, %p71
      %p73 = scmp.ne.s32.totalorder %s62, %s65
      %p74 = scmp.eq.s32.totalorder %s17, 15
      %p75 = por %p73, %p74
      %p76 = scmp.ne.s32.totalorder %s65, %s66
      %p77 = scmp.eq.s32.totalorder %s17, 0
      %p78 = por %p76, %p77
      %p79 = scmp.ne.s32.totalorder %s65, %s66
      %p80 = scmp.eq.s32.totalorder %s18, 15
      %p81 = por %p79, %p80
      %p83 = scmp.ne.s32.totalorder %s66, %s82
      %p84 = scmp.eq.s32.totalorder %s18, 0
      %p85 = por %p83, %p84
      %s87 = sadd.s32 %s86, 1
      %p90 = scmp.eq.s32.totalorder %s12, 15
      %p91 = scmp.ne.s32.totalorder %s86, %s88
      %p92 = scmp.eq.s32.totalorder %s12, 0
      %p93 = por %p91, %p92
      %p94 = scmp.ne.s32.totalorder %s86, %s88
      %p95 = scmp.eq.s32.totalorder %s17, 15
      %p96 = por %p94, %p95
      %p97 = scmp.ne.s32.totalorder %s88, %s89
      %p98 = scmp.eq.s32.totalorder %s17, 0
      %p99 = por %p97, %p98
      %p100 = scmp.ne.s32.totalorder %s88, %s89
      %p101 = scmp.eq.s32.totalorder %s18, 15
      %p102 = por %p100, %p101
      %p104 = scmp.ne.s32.totalorder %s89, %s103
      %p105 = scmp.eq.s32.totalorder %s18, 0
      %p106 = por %p104, %p105
      %s108 = sadd.s32 %s107, 1
      %p111 = scmp.eq.s32.totalorder %s12, 15
      %p112 = scmp.ne.s32.totalorder %s107, %s109
      %p113 = scmp.eq.s32.totalorder %s12, 0
      %p114 = por %p112, %p113
      %p115 = scmp.ne.s32.totalorder %s107, %s109
      %p116 = scmp.eq.s32.totalorder %s17, 15
      %p117 = por %p115, %p116
      %p118 = scmp.ne.s32.totalorder %s109, %s110
      %p119 = scmp.eq.s32.totalorder %s17, 0
      %p120 = por %p118, %p119
      %p121 = scmp.ne.s32.totalorder %s109, %s110
      %p122 = scmp.eq.s32.totalorder %s18, 15
      %p123 = por %p121, %p122
      %p125 = scmp.ne.s32.totalorder %s110, %s124
      %p126 = scmp.eq.s32.totalorder %s18, 0
      %p127 = por %p125, %p126
      %s129 = sadd.s32 %s128, 1
      %p132 = scmp.eq.s32.totalorder %s12, 15
      %p133 = scmp.ne.s32.totalorder %s128, %s130
      %p134 = scmp.eq.s32.totalorder %s12, 0
      %p135 = por %p133, %p134
      %p136 = scmp.ne.s32.totalorder %s128, %s130
      %p137 = scmp.eq.s32.totalorder %s17, 15
      %p138 = por %p136, %p137
      %p139 = scmp.ne.s32.totalorder %s130, %s131
      %p140 = scmp.eq.s32.totalorder %s17, 0
      %p141 = por %p139, %p140
      %p142 = scmp.ne.s32.totalorder %s130, %s131
      %p143 = scmp.eq.s32.totalorder %s18, 15
      %p144 = por %p142, %p143
      %p146 = scmp.ne.s32.totalorder %s131, %s145
      %p147 = scmp.eq.s32.totalorder %s18, 0
      %p148 = por %p146, %p147
      %s150 = sadd.s32 %s149, 1
      %p153 = scmp.eq.s32.totalorder %s12, 15
      %p154 = scmp.ne.s32.totalorder %s149, %s151
      %p155 = scmp.eq.s32.totalorder %s12, 0
      %p156 = por %p154, %p155
      %p157 = scmp.ne.s32.totalorder %s149, %s151
      %p158 = scmp.eq.s32.totalorder %s17, 15
      %p159 = por %p157, %p158
      %p160 = scmp.ne.s32.totalorder %s151, %s152
      %p161 = scmp.eq.s32.totalorder %s17, 0
      %p162 = por %p160, %p161
      %p163 = scmp.ne.s32.totalorder %s151, %s152
      %p164 = scmp.eq.s32.totalorder %s18, 15
      %p165 = por %p163, %p164
      %p167 = scmp.ne.s32.totalorder %s152, %s166
      %p168 = scmp.eq.s32.totalorder %s18, 0
      %p169 = por %p167, %p168
      %s170 = ssub.s32 %s19, %s31
      %p171 = scmp.eq.s32.totalorder %s170, 0
      %s173 = sadd.s32 %s172, 1
      %s174 = scalar_select %p171, %s172, %s173
      %p177 = pneg %p171
      %p178 = scmp.eq.s32.totalorder %s12, 15
      %p179 = por %p177, %p178
      %p180 = scmp.ne.s32.totalorder %s172, %s175
      %p181 = scmp.eq.s32.totalorder %s12, 0
      %p182 = por %p180, %p181
      %p183 = scmp.ne.s32.totalorder %s172, %s175
      %p184 = scmp.eq.s32.totalorder %s17, 15
      %p185 = por %p183, %p184
      %p186 = scmp.ne.s32.totalorder %s175, %s176
      %p187 = scmp.eq.s32.totalorder %s17, 0
      %p188 = por %p186, %p187
      %p189 = scmp.ne.s32.totalorder %s175, %s176
      %p190 = scmp.eq.s32.totalorder %s18, 15
      %p191 = por %p189, %p190
      %p193 = scmp.ne.s32.totalorder %s176, %s192
      %p194 = scmp.eq.s32.totalorder %s18, 0
      %p195 = por %p193, %p194
      %p196 = scmp.le.s32.totalorder 1, %s12
      %p197 = scmp.lt.s32.totalorder %s12, 17
      %p198 = pnand %p196, %p197
      %p199 = pneg %p198
      // Predicated region
      $region9: #{irrelevant_learner_forward.3} parent=5 // pred_check
        _
      $region10: #{irrelevant_learner_forward.3} parent=5 // pred_check_branch
        %201 = sbr.rel (%p198) target = $region12
      $region11: #{irrelevant_learner_forward.3} parent=5 // pred_region
        %s202 = ssub.s32 %s12, 1
        // Predicated region
        $region13: #{irrelevant_learner_forward.3} parent=11 // pred_check
          %p203 = pneg %p99
        $region14: #{irrelevant_learner_forward.3} parent=11 // pred_check_branch
          %205 = sbr.rel (%p203) target = $region16
        $region15: #{irrelevant_learner_forward.3} parent=11 // pred_region
          _
        $region16: #{irrelevant_learner_forward.3} parent=11 // pred_fallthru
          _
        // Predicated region
        $region17: #{irrelevant_learner_forward.3} parent=11 // pred_check
          %p206 = pneg %p120
        $region18: #{irrelevant_learner_forward.3} parent=11 // pred_check_branch
          %208 = sbr.rel (%p206) target = $region20
        $region19: #{irrelevant_learner_forward.3} parent=11 // pred_region
          _
        $region20: #{irrelevant_learner_forward.3} parent=11 // pred_fallthru
          _
        // Predicated region
        $region21: #{irrelevant_learner_forward.3} parent=11 // pred_check
          %p209 = pneg %p141
        $region22: #{irrelevant_learner_forward.3} parent=11 // pred_check_branch
          %211 = sbr.rel (%p209) target = $region24
        $region23: #{irrelevant_learner_forward.3} parent=11 // pred_region
          _
        $region24: #{irrelevant_learner_forward.3} parent=11 // pred_fallthru
          _
        // Predicated region
        $region25: #{irrelevant_learner_forward.3} parent=11 // pred_check
          %p212 = pneg %p162
        $region26: #{irrelevant_learner_forward.3} parent=11 // pred_check_branch
          %214 = sbr.rel (%p212) target = $region28
        $region27: #{irrelevant_learner_forward.3} parent=11 // pred_region
          _
        $region28: #{irrelevant_learner_forward.3} parent=11 // pred_fallthru
          _
      $region12: #{irrelevant_learner_forward.3} parent=5 // pred_fallthru
        _
      %p215 = scmp.lt.s32.totalorder %s12, 16
      // Predicated region
      $region29: #{irrelevant_learner_forward.3} parent=5 // pred_check
        %p216 = pneg %p215
      $region30: #{irrelevant_learner_forward.3} parent=5 // pred_check_branch
        %218 = sbr.rel (%p216) target = $region32
      $region31: #{irrelevant_learner_forward.3} parent=5 // pred_region
        // Predicated region
        $region33: #{irrelevant_learner_forward.3} parent=31 // pred_check
          %p219 = pneg %p46
        $region34: #{irrelevant_learner_forward.3} parent=31 // pred_check_branch
          %221 = sbr.rel (%p219) target = $region36
        $region35: #{irrelevant_learner_forward.3} parent=31 // pred_region
          %s222 = sand.u32 %s36, 1
          %s223 = sand.u32 %s36, 1
          %s224 = smul.addr %s223, 64
          %s225 = scalar_lea.vmem [#allocation3], %s224
          %s226 = smul.u32 16, %s19
          %s227 = smul.addr %s226, 4
          %s228 = sadd.s32 %s20, %s227
          %s229 = smul.addr %s228, 4
          %s230 = scalar_lea.vmem %s0, %s229
          // Predicated region
          $region37: #{irrelevant_learner_forward.3} parent=35 // pred_check
            _
          $region38: #{irrelevant_learner_forward.3} parent=35 // pred_check_branch
            %232 = sbr.rel (0) target = $region40
          $region39: #{irrelevant_learner_forward.3} parent=35 // pred_region
            // Predicated region
            $region41: #{irrelevant_learner_forward.3} parent=39 // pred_check
              _
            $region42: #{irrelevant_learner_forward.3} parent=39 // pred_check_branch
              %234 = sbr.rel target = $region44
            $region43: #{irrelevant_learner_forward.3} parent=39 // pred_region
              // Predicated region
              $region56: #{irrelevant_learner_forward.3} parent=43 // pred_check
                _
              $region57: #{irrelevant_learner_forward.3} parent=43 // pred_check_branch
                %279 = sbr.rel (0) target = $region59
              $region58: #{irrelevant_learner_forward.3} parent=43 // pred_region
                loop: start=0, step=1, limit=1
                $region60: #{irrelevant_learner_forward.3} parent=58 // loop_pre_header
                  _
                $region61: #{irrelevant_learner_forward.3} parent=58 // loop_header
                  %s281 = sphi 0, %s285
                  %p282 = scmp.ge.s32.totalorder %s281, 1
                  %s286 = sphi %s230, %s230
                  %s287 = sphi %s225, %s225
                $region62: #{irrelevant_learner_forward.3} parent=58 // loop_header_branch
                  %284 = sbr.rel (%p282) target = $region66
                $region63: #{irrelevant_learner_forward.3} parent=58 // loop_body
                  _
                $region64: #{irrelevant_learner_forward.3} parent=58 // loop_footer
                  %s285 = sadd.s32 1, %s281
                $region65: #{irrelevant_learner_forward.3} parent=58 // loop_footer_branch
                  %280 = sbr.rel target = $region61
                $region66: #{irrelevant_learner_forward.3} parent=58 // loop_exit
                  _
                loop: start=0, step=1, limit=1
                $region67: #{irrelevant_learner_forward.3} parent=58 // loop_pre_header
                  _
                $region68: #{irrelevant_learner_forward.3} parent=58 // loop_header
                  %s290 = sphi 0, %s294
                  %p291 = scmp.ge.s32.totalorder %s290, 1
                  %s295 = sphi %s230, %s230
                  %s296 = sphi %s225, %s225
                $region69: #{irrelevant_learner_forward.3} parent=58 // loop_header_branch
                  %293 = sbr.rel (%p291) target = $region73
                $region70: #{irrelevant_learner_forward.3} parent=58 // loop_body
                  %v297 = vld [vmem:[%s295] sm:$0xf]
                  %298 = vst [vmem:[%s296] sm:$0xf] %v297
                  %v299 = vld [vmem:[%s295 + $0x10] sm:$0xf]
                  %300 = vst [vmem:[%s296 + $0x4] sm:$0xf] %v299
                  %v301 = vld [vmem:[%s295 + $0x20] sm:$0xf]
                  %302 = vst [vmem:[%s296 + $0x8] sm:$0xf] %v301
                  %v303 = vld [vmem:[%s295 + $0x30] sm:$0xf]
                  %304 = vst [vmem:[%s296 + $0xc] sm:$0xf] %v303
                  %v305 = vld [vmem:[%s295 + $0x40] sm:$0xf]
                  %306 = vst [vmem:[%s296 + $0x10] sm:$0xf] %v305
                  %v307 = vld [vmem:[%s295 + $0x50] sm:$0xf]
                  %308 = vst [vmem:[%s296 + $0x14] sm:$0xf] %v307
                  %v309 = vld [vmem:[%s295 + $0x60] sm:$0xf]
                  %310 = vst [vmem:[%s296 + $0x18] sm:$0xf] %v309
                  %v311 = vld [vmem:[%s295 + $0x70] sm:$0xf]
                  %312 = vst [vmem:[%s296 + $0x1c] sm:$0xf] %v311
                  %v313 = vld [vmem:[%s295 + $0x80] sm:$0xf]
                  %314 = vst [vmem:[%s296 + $0x20] sm:$0xf] %v313
                  %v315 = vld [vmem:[%s295 + $0x90] sm:$0xf]
                  %316 = vst [vmem:[%s296 + $0x24] sm:$0xf] %v315
                  %v317 = vld [vmem:[%s295 + $0xa0] sm:$0xf]
                  %318 = vst [vmem:[%s296 + $0x28] sm:$0xf] %v317
                  %v319 = vld [vmem:[%s295 + $0xb0] sm:$0xf]
                  %320 = vst [vmem:[%s296 + $0x2c] sm:$0xf] %v319
                  %v321 = vld [vmem:[%s295 + $0xc0] sm:$0xf]
                  %322 = vst [vmem:[%s296 + $0x30] sm:$0xf] %v321
                  %v323 = vld [vmem:[%s295 + $0xd0] sm:$0xf]
                  %324 = vst [vmem:[%s296 + $0x34] sm:$0xf] %v323
                  %v325 = vld [vmem:[%s295 + $0xe0] sm:$0xf]
                  %326 = vst [vmem:[%s296 + $0x38] sm:$0xf] %v325
                  %v327 = vld [vmem:[%s295 + $0xf0] sm:$0xf]
                  %328 = vst [vmem:[%s296 + $0x3c] sm:$0xf] %v327
                $region71: #{irrelevant_learner_forward.3} parent=58 // loop_footer
                  %s294 = sadd.s32 1, %s290
                $region72: #{irrelevant_learner_forward.3} parent=58 // loop_footer_branch
                  %289 = sbr.rel target = $region68
                $region73: #{irrelevant_learner_forward.3} parent=58 // loop_exit
                  _
              $region59: #{irrelevant_learner_forward.3} parent=43 // pred_fallthru
                _
            $region44: #{irrelevant_learner_forward.3} parent=39 // pred_fallthru
              _
            // Predicated region
            $region45: #{irrelevant_learner_forward.3} parent=39 // pred_check
              _
            $region46: #{irrelevant_learner_forward.3} parent=39 // pred_check_branch
              %236 = sbr.rel (0) target = $region48
            $region47: #{irrelevant_learner_forward.3} parent=39 // pred_region
              loop: start=0, step=1, limit=1
              $region49: #{irrelevant_learner_forward.3} parent=47 // loop_pre_header
                _
              $region50: #{irrelevant_learner_forward.3} parent=47 // loop_header
                %s239 = sphi 0, %s243
                %p240 = scmp.ge.s32.totalorder %s239, 1
                %s244 = sphi %s230, %s230
                %s245 = sphi %s225, %s225
              $region51: #{irrelevant_learner_forward.3} parent=47 // loop_header_branch
                %242 = sbr.rel (%p240) target = $region55
              $region52: #{irrelevant_learner_forward.3} parent=47 // loop_body
                %v246 = vld [vmem:[%s244] sm:$0xf]
                %247 = vst [vmem:[%s245] sm:$0xf] %v246
                %v248 = vld [vmem:[%s244 + $0x10] sm:$0xf]
                %249 = vst [vmem:[%s245 + $0x4] sm:$0xf] %v248
                %v250 = vld [vmem:[%s244 + $0x20] sm:$0xf]
                %251 = vst [vmem:[%s245 + $0x8] sm:$0xf] %v250
                %v252 = vld [vmem:[%s244 + $0x30] sm:$0xf]
                %253 = vst [vmem:[%s245 + $0xc] sm:$0xf] %v252
                %v254 = vld [vmem:[%s244 + $0x40] sm:$0xf]
                %255 = vst [vmem:[%s245 + $0x10] sm:$0xf] %v254
                %v256 = vld [vmem:[%s244 + $0x50] sm:$0xf]
                %257 = vst [vmem:[%s245 + $0x14] sm:$0xf] %v256
                %v258 = vld [vmem:[%s244 + $0x60] sm:$0xf]
                %259 = vst [vmem:[%s245 + $0x18] sm:$0xf] %v258
                %v260 = vld [vmem:[%s244 + $0x70] sm:$0xf]
                %261 = vst [vmem:[%s245 + $0x1c] sm:$0xf] %v260
                %v262 = vld [vmem:[%s244 + $0x80] sm:$0xf]
                %263 = vst [vmem:[%s245 + $0x20] sm:$0xf] %v262
                %v264 = vld [vmem:[%s244 + $0x90] sm:$0xf]
                %265 = vst [vmem:[%s245 + $0x24] sm:$0xf] %v264
                %v266 = vld [vmem:[%s244 + $0xa0] sm:$0xf]
                %267 = vst [vmem:[%s245 + $0x28] sm:$0xf] %v266
                %v268 = vld [vmem:[%s244 + $0xb0] sm:$0xf]
                %269 = vst [vmem:[%s245 + $0x2c] sm:$0xf] %v268
                %v270 = vld [vmem:[%s244 + $0xc0] sm:$0xf]
                %271 = vst [vmem:[%s245 + $0x30] sm:$0xf] %v270
                %v272 = vld [vmem:[%s244 + $0xd0] sm:$0xf]
                %273 = vst [vmem:[%s245 + $0x34] sm:$0xf] %v272
                %v274 = vld [vmem:[%s244 + $0xe0] sm:$0xf]
                %275 = vst [vmem:[%s245 + $0x38] sm:$0xf] %v274
                %v276 = vld [vmem:[%s244 + $0xf0] sm:$0xf]
                %277 = vst [vmem:[%s245 + $0x3c] sm:$0xf] %v276
              $region53: #{irrelevant_learner_forward.3} parent=47 // loop_footer
                %s243 = sadd.s32 1, %s239
              $region54: #{irrelevant_learner_forward.3} parent=47 // loop_footer_branch
                %238 = sbr.rel target = $region50
              $region55: #{irrelevant_learner_forward.3} parent=47 // loop_exit
                _
            $region48: #{irrelevant_learner_forward.3} parent=39 // pred_fallthru
              _
          $region40: #{irrelevant_learner_forward.3} parent=35 // pred_fallthru
            _
          %329 = vnop
        $region36: #{irrelevant_learner_forward.3} parent=31 // pred_fallthru
          _
        // Predicated region
        $region74: #{irrelevant_learner_forward.3} parent=31 // pred_check
          %p330 = pneg %p72
        $region75: #{irrelevant_learner_forward.3} parent=31 // pred_check_branch
          %332 = sbr.rel (%p330) target = $region77
        $region76: #{irrelevant_learner_forward.3} parent=31 // pred_region
          %s333 = smul.u32 16, %s20
          %p334 = scmp.lt.s32.totalorder %s333, 63
          %s335 = scalar_select %p334, %s333, 63
          %s336 = smul.addr %s335, 4
          %s337 = scalar_lea.vmem %s1, %s336
          %s338 = smul.u32 16, %s20
        $region77: #{irrelevant_learner_forward.3} parent=31 // pred_fallthru
          _
      $region32: #{irrelevant_learner_forward.3} parent=5 // pred_fallthru
        _
      %p339 = scmp.le.s32.totalorder 1, %s12
      %p340 = scmp.lt.s32.totalorder %s12, 17
      %p341 = pnand %p339, %p340
      %p342 = pneg %p341
      // Predicated region
      $region78: #{irrelevant_learner_forward.3} parent=5 // pred_check
        _
      $region79: #{irrelevant_learner_forward.3} parent=5 // pred_check_branch
        %344 = sbr.rel (%p341) target = $region81
      $region80: #{irrelevant_learner_forward.3} parent=5 // pred_region
        %s345 = ssub.s32 %s12, 1
        %s346 = sand.u32 %s39, 1
        %s347 = sand.u32 %s39, 1
        %s348 = smul.addr %s347, 64
        %s349 = scalar_lea.vmem [#allocation3], %s348
        // Predicated region
        $region82: #{irrelevant_learner_forward.3} parent=80 // pred_check
          %p350 = pneg %p52
        $region83: #{irrelevant_learner_forward.3} parent=80 // pred_check_branch
          %352 = sbr.rel (%p350) target = $region85
        $region84: #{irrelevant_learner_forward.3} parent=80 // pred_region
          _
        $region85: #{irrelevant_learner_forward.3} parent=80 // pred_fallthru
          _
        %s353 = sand.u32 %s39, 1
        %s354 = sand.u32 %s39, 1
        %s355 = smul.addr %s354, 64
        %s356 = scalar_lea.vmem [#allocation3], %s355
        %p357 = pneg %p52
        %p358 = pneg %p49
        %s359 = smul.u32 16, %s22
        %p360 = scmp.lt.s32.totalorder %s359, 63
        %s361 = scalar_select %p360, %s359, 63
        %s362 = smul.addr %s361, 4
        %s363 = scalar_lea.vmem %s1, %s362
        %p364 = pneg %p78
        %p365 = pneg %p75
        %p366 = pneg %p99
        %p367 = pneg %p96
        %p368 = pneg %p120
        %p369 = pneg %p117
        %p370 = pneg %p141
        %p371 = pneg %p138
        %p372 = pneg %p162
        %p373 = pneg %p159
        %p374 = pneg %p188
        %p375 = pneg %p185
        %s376 = smul.u32 16, %s21
        %p377 = scmp.lt.s32.totalorder %s376, 63
        %s378 = scalar_select %p377, %s376, 63
        %s379 = smul.addr %s378, 8
        %s380 = scalar_lea.vmem %s6, %s379
        %s381 = smul.u32 16, %s21
        %s382 = smul.u32 16, %s22
        %p383 = scmp.lt.s32.totalorder %s382, 63
        %s384 = scalar_select %p383, %s382, 63
        %s385 = smul.addr %s384, 4
        %s386 = scalar_lea.vmem %s1, %s385
        %s387 = smul.u32 16, %s22
        %s388 = smul.u32 16, %s21
        %p389 = scmp.lt.s32.totalorder %s388, 63
        %s390 = scalar_select %p389, %s388, 63
        %s391 = smul.addr %s390, 8
        %s392 = scalar_lea.vmem %s6, %s391
        %s393 = smul.u32 16, %s21
        %p395 = scmp.eq.s32.totalorder %s22, 0
        // Predicated region
        $region86: #{irrelevant_learner_forward.3} parent=80 // pred_check
          %p396 = pneg %p395
        $region87: #{irrelevant_learner_forward.3} parent=80 // pred_check_branch
          %398 = sbr.rel (%p396) target = $region89
        $region88: #{irrelevant_learner_forward.3} parent=80 // pred_region
          %399 = vst [vmem:[#allocation2] sm:$0xff] 0.0
          %400 = vst [vmem:[#allocation2 + $0x8] sm:$0xff] 0.0
          %401 = vst [vmem:[#allocation2 + $0x10] sm:$0xff] 0.0
          %402 = vst [vmem:[#allocation2 + $0x18] sm:$0xff] 0.0
          %403 = vst [vmem:[#allocation2 + $0x20] sm:$0xff] 0.0
          %404 = vst [vmem:[#allocation2 + $0x28] sm:$0xff] 0.0
          %405 = vst [vmem:[#allocation2 + $0x30] sm:$0xff] 0.0
          %406 = vst [vmem:[#allocation2 + $0x38] sm:$0xff] 0.0
          %407 = vst [vmem:[#allocation2 + $0x40] sm:$0xff] 0.0
          %408 = vst [vmem:[#allocation2 + $0x48] sm:$0xff] 0.0
          %409 = vst [vmem:[#allocation2 + $0x50] sm:$0xff] 0.0
          %410 = vst [vmem:[#allocation2 + $0x58] sm:$0xff] 0.0
          %411 = vst [vmem:[#allocation2 + $0x60] sm:$0xff] 0.0
          %412 = vst [vmem:[#allocation2 + $0x68] sm:$0xff] 0.0
          %413 = vst [vmem:[#allocation2 + $0x70] sm:$0xff] 0.0
          %414 = vst [vmem:[#allocation2 + $0x78] sm:$0xff] 0.0
        $region89: #{irrelevant_learner_forward.3} parent=80 // pred_fallthru
          _
        %v415 = vld [vmem:[%s386] sm:$0xf]
        %v416 = vld [vmem:[%s386 + $0x4] sm:$0xf]
        %v417 = vld [vmem:[%s386 + $0x8] sm:$0xf]
        %v418 = vld [vmem:[%s386 + $0xc] sm:$0xf]
        %v419 = vld [vmem:[%s386 + $0x10] sm:$0xf]
        %v420 = vld [vmem:[%s386 + $0x14] sm:$0xf]
        %v421 = vld [vmem:[%s386 + $0x18] sm:$0xf]
        %v422 = vld [vmem:[%s386 + $0x1c] sm:$0xf]
        %v423 = vld [vmem:[%s386 + $0x20] sm:$0xf]
        %v424 = vld [vmem:[%s386 + $0x24] sm:$0xf]
        %v425 = vld [vmem:[%s386 + $0x28] sm:$0xf]
        %v426 = vld [vmem:[%s386 + $0x2c] sm:$0xf]
        %v427 = vld [vmem:[%s386 + $0x30] sm:$0xf]
        %v428 = vld [vmem:[%s386 + $0x34] sm:$0xf]
        %v429 = vld [vmem:[%s386 + $0x38] sm:$0xf]
        %v430 = vld [vmem:[%s386 + $0x3c] sm:$0xf]
        %v431 = vunpack.c.l.bf16 %v415
        %v432 = vunpack.c.l.bf16 %v416
        %v433 = vunpack.c.l.bf16 %v417
        %v434 = vunpack.c.l.bf16 %v418
        %v435 = vunpack.c.l.bf16 %v419
        %v436 = vunpack.c.l.bf16 %v420
        %v437 = vunpack.c.l.bf16 %v421
        %v438 = vunpack.c.l.bf16 %v422
        %v439 = vunpack.c.l.bf16 %v423
        %v440 = vunpack.c.l.bf16 %v424
        %v441 = vunpack.c.l.bf16 %v425
        %v442 = vunpack.c.l.bf16 %v426
        %v443 = vunpack.c.l.bf16 %v427
        %v444 = vunpack.c.l.bf16 %v428
        %v445 = vunpack.c.l.bf16 %v429
        %v446 = vunpack.c.l.bf16 %v430
        %v447 = vld [vmem:[%s2] sm:$0x1]
        %v449 = vlaneseq
        %v450 = vshrl.u32 %v449, 7
        %v451 = vsub.s32 0, %v450
        %v452 = vrot.slane %v447, %v451
        %v454 = vmul.f32 %v431, %v452
        %v455 = vmul.f32 %v432, %v452
        %v456 = vmul.f32 %v433, %v452
        %v457 = vmul.f32 %v434, %v452
        %v458 = vmul.f32 %v435, %v452
        %v459 = vmul.f32 %v436, %v452
        %v460 = vmul.f32 %v437, %v452
        %v461 = vmul.f32 %v438, %v452
        %v462 = vmul.f32 %v439, %v452
        %v463 = vmul.f32 %v440, %v452
        %v464 = vmul.f32 %v441, %v452
        %v465 = vmul.f32 %v442, %v452
        %v466 = vmul.f32 %v443, %v452
        %v467 = vmul.f32 %v444, %v452
        %v468 = vmul.f32 %v445, %v452
        %v469 = vmul.f32 %v446, %v452
        %v470 = vld [vmem:[%s3] sm:$0x1]
        %v472 = vlaneseq
        %v473 = vshrl.u32 %v472, 7
        %v474 = vsub.s32 0, %v473
        %v475 = vrot.slane %v470, %v474
        %v477 = vadd.f32 %v454, %v475
        %v478 = vadd.f32 %v455, %v475
        %v479 = vadd.f32 %v456, %v475
        %v480 = vadd.f32 %v457, %v475
        %v481 = vadd.f32 %v458, %v475
        %v482 = vadd.f32 %v459, %v475
        %v483 = vadd.f32 %v460, %v475
        %v484 = vadd.f32 %v461, %v475
        %v485 = vadd.f32 %v462, %v475
        %v486 = vadd.f32 %v463, %v475
        %v487 = vadd.f32 %v464, %v475
        %v488 = vadd.f32 %v465, %v475
        %v489 = vadd.f32 %v466, %v475
        %v490 = vadd.f32 %v467, %v475
        %v491 = vadd.f32 %v468, %v475
        %v492 = vadd.f32 %v469, %v475
        %v493 = vmax.f32 %v477, 0.0
        %v494 = vmax.f32 %v478, 0.0
        %v495 = vmax.f32 %v479, 0.0
        %v496 = vmax.f32 %v480, 0.0
        %v497 = vmax.f32 %v481, 0.0
        %v498 = vmax.f32 %v482, 0.0
        %v499 = vmax.f32 %v483, 0.0
        %v500 = vmax.f32 %v484, 0.0
        %v501 = vmax.f32 %v485, 0.0
        %v502 = vmax.f32 %v486, 0.0
        %v503 = vmax.f32 %v487, 0.0
        %v504 = vmax.f32 %v488, 0.0
        %v505 = vmax.f32 %v489, 0.0
        %v506 = vmax.f32 %v490, 0.0
        %v507 = vmax.f32 %v491, 0.0
        %v508 = vmax.f32 %v492, 0.0
        %v509 = vld [vmem:[#allocation2] sm:$0xff]
        %v510 = vld [vmem:[#allocation2 + $0x8] sm:$0xff]
        %v511 = vld [vmem:[#allocation2 + $0x10] sm:$0xff]
        %v512 = vld [vmem:[#allocation2 + $0x18] sm:$0xff]
        %v513 = vld [vmem:[#allocation2 + $0x20] sm:$0xff]
        %v514 = vld [vmem:[#allocation2 + $0x28] sm:$0xff]
        %v515 = vld [vmem:[#allocation2 + $0x30] sm:$0xff]
        %v516 = vld [vmem:[#allocation2 + $0x38] sm:$0xff]
        %v517 = vld [vmem:[#allocation2 + $0x40] sm:$0xff]
        %v518 = vld [vmem:[#allocation2 + $0x48] sm:$0xff]
        %v519 = vld [vmem:[#allocation2 + $0x50] sm:$0xff]
        %v520 = vld [vmem:[#allocation2 + $0x58] sm:$0xff]
        %v521 = vld [vmem:[#allocation2 + $0x60] sm:$0xff]
        %v522 = vld [vmem:[#allocation2 + $0x68] sm:$0xff]
        %v523 = vld [vmem:[#allocation2 + $0x70] sm:$0xff]
        %v524 = vld [vmem:[#allocation2 + $0x78] sm:$0xff]
        %v525 = vld [vmem:[%s349] sm:$0xf]
        %v526 = vld [vmem:[%s349 + $0x4] sm:$0xf]
        %v527 = vld [vmem:[%s349 + $0x8] sm:$0xf]
        %v528 = vld [vmem:[%s349 + $0xc] sm:$0xf]
        %v529 = vld [vmem:[%s349 + $0x10] sm:$0xf]
        %v530 = vld [vmem:[%s349 + $0x14] sm:$0xf]
        %v531 = vld [vmem:[%s349 + $0x18] sm:$0xf]
        %v532 = vld [vmem:[%s349 + $0x1c] sm:$0xf]
        %v533 = vld [vmem:[%s349 + $0x20] sm:$0xf]
        %v534 = vld [vmem:[%s349 + $0x24] sm:$0xf]
        %v535 = vld [vmem:[%s349 + $0x28] sm:$0xf]
        %v536 = vld [vmem:[%s349 + $0x2c] sm:$0xf]
        %v537 = vld [vmem:[%s349 + $0x30] sm:$0xf]
        %v538 = vld [vmem:[%s349 + $0x34] sm:$0xf]
        %v539 = vld [vmem:[%s349 + $0x38] sm:$0xf]
        %v540 = vld [vmem:[%s349 + $0x3c] sm:$0xf]
        %v541 = vpack.c.bf16 %v494, %v493
        %v542 = vpack.c.bf16 %v496, %v495
        %v543 = vpack.c.bf16 %v498, %v497
        %v544 = vpack.c.bf16 %v500, %v499
        %v545 = vpack.c.bf16 %v502, %v501
        %v546 = vpack.c.bf16 %v504, %v503
        %v547 = vpack.c.bf16 %v506, %v505
        %v548 = vpack.c.bf16 %v508, %v507
        %v565 = vunpack.c.l.b16 %v525
        %v566 = vunpack.c.l.b16 %v526
        %v567 = vunpack.c.l.b16 %v527
        %v568 = vunpack.c.l.b16 %v528
        %v569 = vunpack.c.l.b16 %v529
        %v570 = vunpack.c.l.b16 %v530
        %v571 = vunpack.c.l.b16 %v531
        %v572 = vunpack.c.l.b16 %v532
        %v573 = vunpack.c.l.b16 %v533
        %v574 = vunpack.c.l.b16 %v534
        %v575 = vunpack.c.l.b16 %v535
        %v576 = vunpack.c.l.b16 %v536
        %v577 = vunpack.c.l.b16 %v537
        %v578 = vunpack.c.l.b16 %v538
        %v579 = vunpack.c.l.b16 %v539
        %v580 = vunpack.c.l.b16 %v540
        %v581 = vpack.c.b16 %v566, %v565
        %v582 = vpack.c.b16 %v568, %v567
        %v583 = vpack.c.b16 %v570, %v569
        %v584 = vpack.c.b16 %v572, %v571
        %v585 = vpack.c.b16 %v574, %v573
        %v586 = vpack.c.b16 %v576, %v575
        %v587 = vpack.c.b16 %v578, %v577
        %v588 = vpack.c.b16 %v580, %v579
        %597 = vmatprep.subr.bf16.mxu0 0
        %598 = vmatpush1.bf16.msra.mxu0 %v541
        %599 = vmatprep.subr.bf16.mxu0 0
        %600 = vmatpush1.bf16.msra.mxu0 %v542
        %601 = vmatprep.subr.bf16.mxu0 0
        %602 = vmatpush1.bf16.msra.mxu0 %v543
        %603 = vmatprep.subr.bf16.mxu0 0
        %604 = vmatpush1.bf16.msra.mxu0 %v544
        %605 = vmatprep.subr.bf16.mxu0 0
        %606 = vmatpush1.bf16.msra.mxu0 %v545
        %607 = vmatprep.subr.bf16.mxu0 0
        %608 = vmatpush1.bf16.msra.mxu0 %v546
        %609 = vmatprep.subr.bf16.mxu0 0
        %610 = vmatpush1.bf16.msra.mxu0 %v547
        %611 = vmatprep.subr.bf16.mxu0 0
        %612 = vmatpush1.bf16.msra.mxu0 %v548
        %613 = vmatprep.subr.bf16.mxu0 0
        %614 = vmatpush1.bf16.msra.mxu0 0
        %615 = vmatprep.subr.bf16.mxu0 0
        %616 = vmatpush1.bf16.msra.mxu0 0
        %617 = vmatprep.subr.bf16.mxu0 0
        %618 = vmatpush1.bf16.msra.mxu0 0
        %619 = vmatprep.subr.bf16.mxu0 0
        %620 = vmatpush1.bf16.msra.mxu0 0
        %621 = vmatprep.subr.bf16.mxu0 0
        %622 = vmatpush1.bf16.msra.mxu0 0
        %623 = vmatprep.subr.bf16.mxu0 0
        %624 = vmatpush1.bf16.msra.mxu0 0
        %625 = vmatprep.subr.bf16.mxu0 0
        %626 = vmatpush1.bf16.msra.mxu0 0
        %627 = vmatprep.subr.bf16.mxu0 0
        %628 = vmatpush1.bf16.msra.mxu0 0
        %629 = vmatprep.mubr.bf16.mxu0 0
        %630 = vmatmul.mubr.bf16.gmra.mrb[0].mxu0 %v581
        %v631 = vpop.f32.mrb[0].mxu0
        %v632 = vadd.f32 0.0, %v631
        %v633 = vpop.f32.mrb[0].mxu0
        %v634 = vpop.f32.mrb[0].mxu0
        %v635 = vadd.f32 0.0, %v634
        %v636 = vpop.f32.mrb[0].mxu0
        %637 = vmatprep.mubr.bf16.mxu0 0
        %638 = vmatmul.mubr.bf16.gmra.mrb[0].mxu0 %v582
        %v639 = vpop.f32.mrb[0].mxu0
        %v640 = vadd.f32 0.0, %v639
        %v641 = vpop.f32.mrb[0].mxu0
        %v642 = vpop.f32.mrb[0].mxu0
        %v643 = vadd.f32 0.0, %v642
        %v644 = vpop.f32.mrb[0].mxu0
        %645 = vmatprep.mubr.bf16.mxu0 0
        %646 = vmatmul.mubr.bf16.gmra.mrb[0].mxu0 %v583
        %v647 = vpop.f32.mrb[0].mxu0
        %v648 = vadd.f32 0.0, %v647
        %v649 = vpop.f32.mrb[0].mxu0
        %v650 = vpop.f32.mrb[0].mxu0
        %v651 = vadd.f32 0.0, %v650
        %v652 = vpop.f32.mrb[0].mxu0
        %653 = vmatprep.mubr.bf16.mxu0 0
        %654 = vmatmul.mubr.bf16.gmra.mrb[0].mxu0 %v584
        %v655 = vpop.f32.mrb[0].mxu0
        %v656 = vadd.f32 0.0, %v655
        %v657 = vpop.f32.mrb[0].mxu0
        %v658 = vpop.f32.mrb[0].mxu0
        %v659 = vadd.f32 0.0, %v658
        %v660 = vpop.f32.mrb[0].mxu0
        %661 = vmatprep.mubr.bf16.mxu0 0
        %662 = vmatmul.mubr.bf16.gmra.mrb[0].mxu0 %v585
        %v663 = vpop.f32.mrb[0].mxu0
        %v664 = vadd.f32 0.0, %v663
        %v665 = vpop.f32.mrb[0].mxu0
        %v666 = vpop.f32.mrb[0].mxu0
        %v667 = vadd.f32 0.0, %v666
        %v668 = vpop.f32.mrb[0].mxu0
        %669 = vmatprep.mubr.bf16.mxu0 0
        %670 = vmatmul.mubr.bf16.gmra.mrb[0].mxu0 %v586
        %v671 = vpop.f32.mrb[0].mxu0
        %v672 = vadd.f32 0.0, %v671
        %v673 = vpop.f32.mrb[0].mxu0
        %v674 = vpop.f32.mrb[0].mxu0
        %v675 = vadd.f32 0.0, %v674
        %v676 = vpop.f32.mrb[0].mxu0
        %677 = vmatprep.mubr.bf16.mxu0 0
        %678 = vmatmul.mubr.bf16.gmra.mrb[0].mxu0 %v587
        %v679 = vpop.f32.mrb[0].mxu0
        %v680 = vadd.f32 0.0, %v679
        %v681 = vpop.f32.mrb[0].mxu0
        %v682 = vpop.f32.mrb[0].mxu0
        %v683 = vadd.f32 0.0, %v682
        %v684 = vpop.f32.mrb[0].mxu0
        %685 = vmatprep.mubr.bf16.mxu0 0
        %686 = vmatmul.mubr.bf16.gmra.mrb[0].mxu0 %v588
        %v687 = vpop.f32.mrb[0].mxu0
        %v688 = vadd.f32 0.0, %v687
        %v689 = vpop.f32.mrb[0].mxu0
        %v690 = vpop.f32.mrb[0].mxu0
        %v691 = vadd.f32 0.0, %v690
        %v692 = vpop.f32.mrb[0].mxu0
        %693 = vdwg.mxu0
        %v694 = vadd.f32 %v509, %v632
        %v695 = vadd.f32 %v510, %v635
        %v696 = vadd.f32 %v511, %v640
        %v697 = vadd.f32 %v512, %v643
        %v698 = vadd.f32 %v513, %v648
        %v699 = vadd.f32 %v514, %v651
        %v700 = vadd.f32 %v515, %v656
        %v701 = vadd.f32 %v516, %v659
        %v702 = vadd.f32 %v517, %v664
        %v703 = vadd.f32 %v518, %v667
        %v704 = vadd.f32 %v519, %v672
        %v705 = vadd.f32 %v520, %v675
        %v706 = vadd.f32 %v521, %v680
        %v707 = vadd.f32 %v522, %v683
        %v708 = vadd.f32 %v523, %v688
        %v709 = vadd.f32 %v524, %v691
        %710 = vst [vmem:[#allocation2] sm:$0xff] %v694
        %711 = vst [vmem:[#allocation2 + $0x8] sm:$0xff] %v695
        %712 = vst [vmem:[#allocation2 + $0x10] sm:$0xff] %v696
        %713 = vst [vmem:[#allocation2 + $0x18] sm:$0xff] %v697
        %714 = vst [vmem:[#allocation2 + $0x20] sm:$0xff] %v698
        %715 = vst [vmem:[#allocation2 + $0x28] sm:$0xff] %v699
        %716 = vst [vmem:[#allocation2 + $0x30] sm:$0xff] %v700
        %717 = vst [vmem:[#allocation2 + $0x38] sm:$0xff] %v701
        %718 = vst [vmem:[#allocation2 + $0x40] sm:$0xff] %v702
        %719 = vst [vmem:[#allocation2 + $0x48] sm:$0xff] %v703
        %720 = vst [vmem:[#allocation2 + $0x50] sm:$0xff] %v704
        %721 = vst [vmem:[#allocation2 + $0x58] sm:$0xff] %v705
        %722 = vst [vmem:[#allocation2 + $0x60] sm:$0xff] %v706
        %723 = vst [vmem:[#allocation2 + $0x68] sm:$0xff] %v707
        %724 = vst [vmem:[#allocation2 + $0x70] sm:$0xff] %v708
        %725 = vst [vmem:[#allocation2 + $0x78] sm:$0xff] %v709
        %p726 = scmp.eq.s32.totalorder %s22, 3
        // Predicated region
        $region90: #{irrelevant_learner_forward.3} parent=80 // pred_check
          %p727 = pneg %p726
        $region91: #{irrelevant_learner_forward.3} parent=80 // pred_check_branch
          %729 = sbr.rel (%p727) target = $region93
        $region92: #{irrelevant_learner_forward.3} parent=80 // pred_region
          %v730 = vld [vmem:[#allocation2] sm:$0xff]
          %v731 = vld [vmem:[#allocation2 + $0x8] sm:$0xff]
          %v732 = vld [vmem:[#allocation2 + $0x10] sm:$0xff]
          %v733 = vld [vmem:[#allocation2 + $0x18] sm:$0xff]
          %v734 = vld [vmem:[#allocation2 + $0x20] sm:$0xff]
          %v735 = vld [vmem:[#allocation2 + $0x28] sm:$0xff]
          %v736 = vld [vmem:[#allocation2 + $0x30] sm:$0xff]
          %v737 = vld [vmem:[#allocation2 + $0x38] sm:$0xff]
          %v738 = vld [vmem:[#allocation2 + $0x40] sm:$0xff]
          %v739 = vld [vmem:[#allocation2 + $0x48] sm:$0xff]
          %v740 = vld [vmem:[#allocation2 + $0x50] sm:$0xff]
          %v741 = vld [vmem:[#allocation2 + $0x58] sm:$0xff]
          %v742 = vld [vmem:[#allocation2 + $0x60] sm:$0xff]
          %v743 = vld [vmem:[#allocation2 + $0x68] sm:$0xff]
          %v744 = vld [vmem:[#allocation2 + $0x70] sm:$0xff]
          %v745 = vld [vmem:[#allocation2 + $0x78] sm:$0xff]
          %v746 = vpack.c.bf16 %v731, %v730
          %v747 = vpack.c.bf16 %v733, %v732
          %v748 = vpack.c.bf16 %v735, %v734
          %v749 = vpack.c.bf16 %v737, %v736
          %v750 = vpack.c.bf16 %v739, %v738
          %v751 = vpack.c.bf16 %v741, %v740
          %v752 = vpack.c.bf16 %v743, %v742
          %v753 = vpack.c.bf16 %v745, %v744
          %v754 = vld [vmem:[%s4] sm:$0xf]
          %v755 = vld [vmem:[%s4 + $0x4] sm:$0xf]
          %v756 = vld [vmem:[%s4 + $0x8] sm:$0xf]
          %v757 = vld [vmem:[%s4 + $0xc] sm:$0xf]
          %v758 = vld [vmem:[%s4 + $0x10] sm:$0xf]
          %v759 = vld [vmem:[%s4 + $0x14] sm:$0xf]
          %v760 = vld [vmem:[%s4 + $0x18] sm:$0xf]
          %v761 = vld [vmem:[%s4 + $0x1c] sm:$0xf]
          %v762 = vld [vmem:[%s4 + $0x20] sm:$0xf]
          %v763 = vld [vmem:[%s4 + $0x24] sm:$0xf]
          %v764 = vld [vmem:[%s4 + $0x28] sm:$0xf]
          %v765 = vld [vmem:[%s4 + $0x2c] sm:$0xf]
          %v766 = vld [vmem:[%s4 + $0x30] sm:$0xf]
          %v767 = vld [vmem:[%s4 + $0x34] sm:$0xf]
          %v768 = vld [vmem:[%s4 + $0x38] sm:$0xf]
          %v769 = vld [vmem:[%s4 + $0x3c] sm:$0xf]
          %v770 = vld [vmem:[%s5] sm:$0x1]
          %v772 = vlaneseq
          %v773 = vshrl.u32 %v772, 7
          %v774 = vsub.s32 0, %v773
          %v775 = vrot.slane %v770, %v774
          %v793 = vunpack.c.l.b16 %v754
          %v794 = vunpack.c.l.b16 %v755
          %v795 = vunpack.c.l.b16 %v756
          %v796 = vunpack.c.l.b16 %v757
          %v797 = vunpack.c.l.b16 %v758
          %v798 = vunpack.c.l.b16 %v759
          %v799 = vunpack.c.l.b16 %v760
          %v800 = vunpack.c.l.b16 %v761
          %v801 = vunpack.c.l.b16 %v762
          %v802 = vunpack.c.l.b16 %v763
          %v803 = vunpack.c.l.b16 %v764
          %v804 = vunpack.c.l.b16 %v765
          %v805 = vunpack.c.l.b16 %v766
          %v806 = vunpack.c.l.b16 %v767
          %v807 = vunpack.c.l.b16 %v768
          %v808 = vunpack.c.l.b16 %v769
          %v809 = vpack.c.b16 %v794, %v793
          %v810 = vpack.c.b16 %v796, %v795
          %v811 = vpack.c.b16 %v798, %v797
          %v812 = vpack.c.b16 %v800, %v799
          %v813 = vpack.c.b16 %v802, %v801
          %v814 = vpack.c.b16 %v804, %v803
          %v815 = vpack.c.b16 %v806, %v805
          %v816 = vpack.c.b16 %v808, %v807
          %825 = vmatprep.subr.bf16.mxu0 0
          %826 = vmatpush1.bf16.msra.mxu0 %v809
          %827 = vmatprep.subr.bf16.mxu0 0
          %828 = vmatpush1.bf16.msra.mxu0 %v810
          %829 = vmatprep.subr.bf16.mxu0 0
          %830 = vmatpush1.bf16.msra.mxu0 %v811
          %831 = vmatprep.subr.bf16.mxu0 0
          %832 = vmatpush1.bf16.msra.mxu0 %v812
          %833 = vmatprep.subr.bf16.mxu0 0
          %834 = vmatpush1.bf16.msra.mxu0 %v813
          %835 = vmatprep.subr.bf16.mxu0 0
          %836 = vmatpush1.bf16.msra.mxu0 %v814
          %837 = vmatprep.subr.bf16.mxu0 0
          %838 = vmatpush1.bf16.msra.mxu0 %v815
          %839 = vmatprep.subr.bf16.mxu0 0
          %840 = vmatpush1.bf16.msra.mxu0 %v816
          %841 = vmatprep.subr.bf16.mxu0 0
          %842 = vmatpush1.bf16.msra.mxu0 0
          %843 = vmatprep.subr.bf16.mxu0 0
          %844 = vmatpush1.bf16.msra.mxu0 0
          %845 = vmatprep.subr.bf16.mxu0 0
          %846 = vmatpush1.bf16.msra.mxu0 0
          %847 = vmatprep.subr.bf16.mxu0 0
          %848 = vmatpush1.bf16.msra.mxu0 0
          %849 = vmatprep.subr.bf16.mxu0 0
          %850 = vmatpush1.bf16.msra.mxu0 0
          %851 = vmatprep.subr.bf16.mxu0 0
          %852 = vmatpush1.bf16.msra.mxu0 0
          %853 = vmatprep.subr.bf16.mxu0 0
          %854 = vmatpush1.bf16.msra.mxu0 0
          %855 = vmatprep.subr.bf16.mxu0 0
          %856 = vmatpush1.bf16.msra.mxu0 0
          %857 = vmatprep.mubr.bf16.mxu0 0
          %858 = vmatmul.mubr.bf16.gmra.mrb[0].mxu0 %v746
          %v859 = vpop.f32.mrb[0].mxu0
          %v860 = vadd.f32 %v775, %v859
          %v861 = vpop.f32.mrb[0].mxu0
          %v862 = vpop.f32.mrb[0].mxu0
          %v863 = vadd.f32 %v775, %v862
          %v864 = vpop.f32.mrb[0].mxu0
          %865 = vmatprep.mubr.bf16.mxu0 0
          %866 = vmatmul.mubr.bf16.gmra.mrb[0].mxu0 %v747
          %v867 = vpop.f32.mrb[0].mxu0
          %v868 = vadd.f32 %v775, %v867
          %v869 = vpop.f32.mrb[0].mxu0
          %v870 = vpop.f32.mrb[0].mxu0
          %v871 = vadd.f32 %v775, %v870
          %v872 = vpop.f32.mrb[0].mxu0
          %873 = vmatprep.mubr.bf16.mxu0 0
          %874 = vmatmul.mubr.bf16.gmra.mrb[0].mxu0 %v748
          %v875 = vpop.f32.mrb[0].mxu0
          %v876 = vadd.f32 %v775, %v875
          %v877 = vpop.f32.mrb[0].mxu0
          %v878 = vpop.f32.mrb[0].mxu0
          %v879 = vadd.f32 %v775, %v878
          %v880 = vpop.f32.mrb[0].mxu0
          %881 = vmatprep.mubr.bf16.mxu0 0
          %882 = vmatmul.mubr.bf16.gmra.mrb[0].mxu0 %v749
          %v883 = vpop.f32.mrb[0].mxu0
          %v884 = vadd.f32 %v775, %v883
          %v885 = vpop.f32.mrb[0].mxu0
          %v886 = vpop.f32.mrb[0].mxu0
          %v887 = vadd.f32 %v775, %v886
          %v888 = vpop.f32.mrb[0].mxu0
          %889 = vmatprep.mubr.bf16.mxu0 0
          %890 = vmatmul.mubr.bf16.gmra.mrb[0].mxu0 %v750
          %v891 = vpop.f32.mrb[0].mxu0
          %v892 = vadd.f32 %v775, %v891
          %v893 = vpop.f32.mrb[0].mxu0
          %v894 = vpop.f32.mrb[0].mxu0
          %v895 = vadd.f32 %v775, %v894
          %v896 = vpop.f32.mrb[0].mxu0
          %897 = vmatprep.mubr.bf16.mxu0 0
          %898 = vmatmul.mubr.bf16.gmra.mrb[0].mxu0 %v751
          %v899 = vpop.f32.mrb[0].mxu0
          %v900 = vadd.f32 %v775, %v899
          %v901 = vpop.f32.mrb[0].mxu0
          %v902 = vpop.f32.mrb[0].mxu0
          %v903 = vadd.f32 %v775, %v902
          %v904 = vpop.f32.mrb[0].mxu0
          %905 = vmatprep.mubr.bf16.mxu0 0
          %906 = vmatmul.mubr.bf16.gmra.mrb[0].mxu0 %v752
          %v907 = vpop.f32.mrb[0].mxu0
          %v908 = vadd.f32 %v775, %v907
          %v909 = vpop.f32.mrb[0].mxu0
          %v910 = vpop.f32.mrb[0].mxu0
          %v911 = vadd.f32 %v775, %v910
          %v912 = vpop.f32.mrb[0].mxu0
          %913 = vmatprep.mubr.bf16.mxu0 0
          %914 = vmatmul.mubr.bf16.gmra.mrb[0].mxu0 %v753
          %v915 = vpop.f32.mrb[0].mxu0
          %v916 = vadd.f32 %v775, %v915
          %v917 = vpop.f32.mrb[0].mxu0
          %v918 = vpop.f32.mrb[0].mxu0
          %v919 = vadd.f32 %v775, %v918
          %v920 = vpop.f32.mrb[0].mxu0
          %921 = vdwg.mxu0
          %v922 = vtanh.pop %v860
          %v923 = vtanh.pop %v863
          %v924 = vtanh.pop %v868
          %v925 = vtanh.pop %v871
          %v926 = vtanh.pop %v876
          %v927 = vtanh.pop %v879
          %v928 = vtanh.pop %v884
          %v929 = vtanh.pop %v887
          %v930 = vtanh.pop %v892
          %v931 = vtanh.pop %v895
          %v932 = vtanh.pop %v900
          %v933 = vtanh.pop %v903
          %v934 = vtanh.pop %v908
          %v935 = vtanh.pop %v911
          %v936 = vtanh.pop %v916
          %v937 = vtanh.pop %v919
          %938 = vst [vmem:[%s392] sm:$0xff] %v922
          %939 = vst [vmem:[%s392 + $0x8] sm:$0xff] %v923
          %940 = vst [vmem:[%s392 + $0x10] sm:$0xff] %v924
          %941 = vst [vmem:[%s392 + $0x18] sm:$0xff] %v925
          %942 = vst [vmem:[%s392 + $0x20] sm:$0xff] %v926
          %943 = vst [vmem:[%s392 + $0x28] sm:$0xff] %v927
          %944 = vst [vmem:[%s392 + $0x30] sm:$0xff] %v928
          %945 = vst [vmem:[%s392 + $0x38] sm:$0xff] %v929
          %946 = vst [vmem:[%s392 + $0x40] sm:$0xff] %v930
          %947 = vst [vmem:[%s392 + $0x48] sm:$0xff] %v931
          %948 = vst [vmem:[%s392 + $0x50] sm:$0xff] %v932
          %949 = vst [vmem:[%s392 + $0x58] sm:$0xff] %v933
          %950 = vst [vmem:[%s392 + $0x60] sm:$0xff] %v934
          %951 = vst [vmem:[%s392 + $0x68] sm:$0xff] %v935
          %952 = vst [vmem:[%s392 + $0x70] sm:$0xff] %v936
          %953 = vst [vmem:[%s392 + $0x78] sm:$0xff] %v937
        $region93: #{irrelevant_learner_forward.3} parent=80 // pred_fallthru
          _
        %s954 = smul.u32 16, %s21
        %p955 = scmp.lt.s32.totalorder %s954, 63
        %s956 = scalar_select %p955, %s954, 63
        %s957 = smul.addr %s956, 8
        %s958 = scalar_lea.vmem %s6, %s957
        // Predicated region
        $region94: #{irrelevant_learner_forward.3} parent=80 // pred_check
          %p959 = pneg %p185
        $region95: #{irrelevant_learner_forward.3} parent=80 // pred_check_branch
          %961 = sbr.rel (%p959) target = $region97
        $region96: #{irrelevant_learner_forward.3} parent=80 // pred_region
          %s962 = smul.u32 16, %s21
        $region97: #{irrelevant_learner_forward.3} parent=80 // pred_fallthru
          _
      $region81: #{irrelevant_learner_forward.3} parent=5 // pred_fallthru
        _
      %p963 = scmp.le.s32.totalorder 2, %s12
      // Predicated region
      $region98: #{irrelevant_learner_forward.3} parent=5 // pred_check
        %p964 = pneg %p963
      $region99: #{irrelevant_learner_forward.3} parent=5 // pred_check_branch
        %966 = sbr.rel (%p964) target = $region101
      $region100: #{irrelevant_learner_forward.3} parent=5 // pred_region
        %s967 = ssub.s32 %s12, 2
        // Predicated region
        $region102: #{irrelevant_learner_forward.3} parent=100 // pred_check
          %p968 = pneg %p191
        $region103: #{irrelevant_learner_forward.3} parent=100 // pred_check_branch
          %970 = sbr.rel (%p968) target = $region105
        $region104: #{irrelevant_learner_forward.3} parent=100 // pred_region
          %s971 = smul.u32 16, %s23
          %p972 = scmp.lt.s32.totalorder %s971, 63
          %s973 = scalar_select %p972, %s971, 63
          %s974 = smul.addr %s973, 8
          %s975 = scalar_lea.vmem %s6, %s974
        $region105: #{irrelevant_learner_forward.3} parent=100 // pred_fallthru
          _
      $region101: #{irrelevant_learner_forward.3} parent=5 // pred_fallthru
        _
    $region6: #{irrelevant_learner_forward.3} parent=1 // loop_footer
      %s16 = sadd.s32 1, %s12
    $region7: #{irrelevant_learner_forward.3} parent=1 // loop_footer_branch
      %11 = sbr.rel target = $region3
    $region8: #{irrelevant_learner_forward.3} parent=1 // loop_exit
      _

// kernel: irrelevant_learner_forward.2
$region0: #{irrelevant_learner_forward.2}
  #allocation0 [shape = 'u32[]', space=smem, size = 0x4, offset = 0x4, fixed_abs, tag = 'smem constant byte address 0x4 - core index']
  #allocation1 [shape = 'u32[144,128]{1,0:T(1,128)}', space=vmem, size = 0x12000, scoped, tag = 'internal scratch']
  #allocation2 [shape = 'f32[128,128]{1,0:T(8,128)}', space=vmem, size = 0x10000, scoped, tag = 'scratch operand']
  %s0 = inlined_call_operand.vmem [shape: bf16[512,512], index: 0, kind: input, shape index: {}]
  %s1 = inlined_call_operand.vmem [shape: bf16[512,128], index: 1, kind: input, shape index: {}]
  %s2 = inlined_call_operand.vmem [shape: bf16[128,128], index: 2, kind: input, shape index: {}]
  %s3 = inlined_call_operand.vmem [shape: f32[1,128], index: 3, kind: input, shape index: {}]
  %s4 = inlined_call_operand.vmem [shape: bf16[512,128], index: 4, kind: output, shape index: {0}]
  %s5 = inlined_call_operand.vmem [shape: f32[4,1,128], index: 5, kind: output, shape index: {1}]
  %s6 = inlined_call_operand.vmem [shape: f32[4,1,128], index: 6, kind: output, shape index: {2}]
  %7 = xla_tuple %s4, %s5, %s6
  %s8 = sld [smem:[#allocation0]]
  $region114: #{irrelevant_learner_forward.2} parent=0
    _
  %s10 = ssub.s32 1, %s8
  %s11 = scalar_select 0, %s10, %s8
  $region1: #{irrelevant_learner_forward.2} parent=0
    #allocation3 [shape = 'u8[65536]{0}', space=vmem, size = 0x10000, scoped, tag = 'input window, operand 0']
    loop: start=0, step=1, limit=18
    $region2: #{irrelevant_learner_forward.2} parent=1 // loop_pre_header
      _
    $region3: #{irrelevant_learner_forward.2} parent=1 // loop_header
      %s13 = sphi 0, %s17
      %p14 = scmp.ge.s32.totalorder %s13, 18
      %s20 = sphi 0, %s32
      %s21 = sphi 0, %s28
      %s22 = sphi 0, %s20
      %s23 = sphi 0, %s21
      %s24 = sphi 0, %s22
      %s25 = sphi 0, %s23
      %s37 = sphi 0, %s39
      %s40 = sphi 0, %s37
      %s41 = sphi 0, %s40
      %s57 = sphi 0, %s41
      %s63 = sphi 0, %s65
      %s66 = sphi 0, %s63
      %s67 = sphi 0, %s66
      %s83 = sphi 0, %s67
      %s87 = sphi 0, %s87
      %s89 = sphi 0, %s87
      %s90 = sphi 0, %s89
      %s104 = sphi 0, %s90
      %s108 = sphi 0, %s108
      %s110 = sphi 0, %s108
      %s111 = sphi 0, %s110
      %s125 = sphi 0, %s111
      %s131 = sphi 0, %s133
      %s134 = sphi 0, %s131
      %s135 = sphi 0, %s134
      %s151 = sphi 0, %s135
      %s157 = sphi 0, %s159
      %s160 = sphi 0, %s157
      %s161 = sphi 0, %s160
      %s177 = sphi 0, %s161
      %s183 = sphi 0, %s185
      %s186 = sphi 0, %s183
      %s187 = sphi 0, %s186
      %s203 = sphi 0, %s187
    $region4: #{irrelevant_learner_forward.2} parent=1 // loop_header_branch
      %16 = sbr.rel (%p14) target = $region8
    $region5: #{irrelevant_learner_forward.2} parent=1 // loop_body
      %s18 = ssub.s32 %s13, 1
      %s19 = ssub.s32 %s13, 2
      %s26 = sadd.s32 1, %s21
      %p27 = scmp.ge.s32.totalorder %s26, 4
      %s28 = scalar_select %p27, 0, %s26
      %s29 = sadd.s32 1, %s20
      %s30 = scalar_select %p27, %s29, %s20
      %p31 = scmp.ge.s32.totalorder %s30, 4
      %s32 = scalar_select %p31, 0, %s30
      %s33 = ssub.s32 %s20, %s32
      %s34 = ssub.s32 %s21, %s28
      %s35 = sor.u32 %s33, %s34
      %p36 = scmp.eq.s32.totalorder %s35, 0
      %s38 = sadd.s32 %s37, 1
      %s39 = scalar_select %p36, %s37, %s38
      %p42 = pneg %p36
      %p43 = scmp.eq.s32.totalorder %s13, 15
      %p44 = por %p42, %p43
      %p45 = scmp.ne.s32.totalorder %s37, %s40
      %p46 = scmp.eq.s32.totalorder %s13, 0
      %p47 = por %p45, %p46
      %p48 = scmp.ne.s32.totalorder %s37, %s40
      %p49 = scmp.eq.s32.totalorder %s18, 15
      %p50 = por %p48, %p49
      %p51 = scmp.ne.s32.totalorder %s40, %s41
      %p52 = scmp.eq.s32.totalorder %s18, 0
      %p53 = por %p51, %p52
      %p54 = scmp.ne.s32.totalorder %s40, %s41
      %p55 = scmp.eq.s32.totalorder %s19, 15
      %p56 = por %p54, %p55
      %p58 = scmp.ne.s32.totalorder %s41, %s57
      %p59 = scmp.eq.s32.totalorder %s19, 0
      %p60 = por %p58, %p59
      %s61 = ssub.s32 %s21, %s28
      %p62 = scmp.eq.s32.totalorder %s61, 0
      %s64 = sadd.s32 %s63, 1
      %s65 = scalar_select %p62, %s63, %s64
      %p68 = pneg %p62
      %p69 = scmp.eq.s32.totalorder %s13, 15
      %p70 = por %p68, %p69
      %p71 = scmp.ne.s32.totalorder %s63, %s66
      %p72 = scmp.eq.s32.totalorder %s13, 0
      %p73 = por %p71, %p72
      %p74 = scmp.ne.s32.totalorder %s63, %s66
      %p75 = scmp.eq.s32.totalorder %s18, 15
      %p76 = por %p74, %p75
      %p77 = scmp.ne.s32.totalorder %s66, %s67
      %p78 = scmp.eq.s32.totalorder %s18, 0
      %p79 = por %p77, %p78
      %p80 = scmp.ne.s32.totalorder %s66, %s67
      %p81 = scmp.eq.s32.totalorder %s19, 15
      %p82 = por %p80, %p81
      %p84 = scmp.ne.s32.totalorder %s67, %s83
      %p85 = scmp.eq.s32.totalorder %s19, 0
      %p86 = por %p84, %p85
      %s88 = sadd.s32 %s87, 1
      %p91 = scmp.eq.s32.totalorder %s13, 15
      %p92 = scmp.ne.s32.totalorder %s87, %s89
      %p93 = scmp.eq.s32.totalorder %s13, 0
      %p94 = por %p92, %p93
      %p95 = scmp.ne.s32.totalorder %s87, %s89
      %p96 = scmp.eq.s32.totalorder %s18, 15
      %p97 = por %p95, %p96
      %p98 = scmp.ne.s32.totalorder %s89, %s90
      %p99 = scmp.eq.s32.totalorder %s18, 0
      %p100 = por %p98, %p99
      %p101 = scmp.ne.s32.totalorder %s89, %s90
      %p102 = scmp.eq.s32.totalorder %s19, 15
      %p103 = por %p101, %p102
      %p105 = scmp.ne.s32.totalorder %s90, %s104
      %p106 = scmp.eq.s32.totalorder %s19, 0
      %p107 = por %p105, %p106
      %s109 = sadd.s32 %s108, 1
      %p112 = scmp.eq.s32.totalorder %s13, 15
      %p113 = scmp.ne.s32.totalorder %s108, %s110
      %p114 = scmp.eq.s32.totalorder %s13, 0
      %p115 = por %p113, %p114
      %p116 = scmp.ne.s32.totalorder %s108, %s110
      %p117 = scmp.eq.s32.totalorder %s18, 15
      %p118 = por %p116, %p117
      %p119 = scmp.ne.s32.totalorder %s110, %s111
      %p120 = scmp.eq.s32.totalorder %s18, 0
      %p121 = por %p119, %p120
      %p122 = scmp.ne.s32.totalorder %s110, %s111
      %p123 = scmp.eq.s32.totalorder %s19, 15
      %p124 = por %p122, %p123
      %p126 = scmp.ne.s32.totalorder %s111, %s125
      %p127 = scmp.eq.s32.totalorder %s19, 0
      %p128 = por %p126, %p127
      %s129 = ssub.s32 %s20, %s32
      %p130 = scmp.eq.s32.totalorder %s129, 0
      %s132 = sadd.s32 %s131, 1
      %s133 = scalar_select %p130, %s131, %s132
      %p136 = pneg %p130
      %p137 = scmp.eq.s32.totalorder %s13, 15
      %p138 = por %p136, %p137
      %p139 = scmp.ne.s32.totalorder %s131, %s134
      %p140 = scmp.eq.s32.totalorder %s13, 0
      %p141 = por %p139, %p140
      %p142 = scmp.ne.s32.totalorder %s131, %s134
      %p143 = scmp.eq.s32.totalorder %s18, 15
      %p144 = por %p142, %p143
      %p145 = scmp.ne.s32.totalorder %s134, %s135
      %p146 = scmp.eq.s32.totalorder %s18, 0
      %p147 = por %p145, %p146
      %p148 = scmp.ne.s32.totalorder %s134, %s135
      %p149 = scmp.eq.s32.totalorder %s19, 15
      %p150 = por %p148, %p149
      %p152 = scmp.ne.s32.totalorder %s135, %s151
      %p153 = scmp.eq.s32.totalorder %s19, 0
      %p154 = por %p152, %p153
      %s155 = ssub.s32 %s20, %s32
      %p156 = scmp.eq.s32.totalorder %s155, 0
      %s158 = sadd.s32 %s157, 1
      %s159 = scalar_select %p156, %s157, %s158
      %p162 = pneg %p156
      %p163 = scmp.eq.s32.totalorder %s13, 15
      %p164 = por %p162, %p163
      %p165 = scmp.ne.s32.totalorder %s157, %s160
      %p166 = scmp.eq.s32.totalorder %s13, 0
      %p167 = por %p165, %p166
      %p168 = scmp.ne.s32.totalorder %s157, %s160
      %p169 = scmp.eq.s32.totalorder %s18, 15
      %p170 = por %p168, %p169
      %p171 = scmp.ne.s32.totalorder %s160, %s161
      %p172 = scmp.eq.s32.totalorder %s18, 0
      %p173 = por %p171, %p172
      %p174 = scmp.ne.s32.totalorder %s160, %s161
      %p175 = scmp.eq.s32.totalorder %s19, 15
      %p176 = por %p174, %p175
      %p178 = scmp.ne.s32.totalorder %s161, %s177
      %p179 = scmp.eq.s32.totalorder %s19, 0
      %p180 = por %p178, %p179
      %s181 = ssub.s32 %s20, %s32
      %p182 = scmp.eq.s32.totalorder %s181, 0
      %s184 = sadd.s32 %s183, 1
      %s185 = scalar_select %p182, %s183, %s184
      %p188 = pneg %p182
      %p189 = scmp.eq.s32.totalorder %s13, 15
      %p190 = por %p188, %p189
      %p191 = scmp.ne.s32.totalorder %s183, %s186
      %p192 = scmp.eq.s32.totalorder %s13, 0
      %p193 = por %p191, %p192
      %p194 = scmp.ne.s32.totalorder %s183, %s186
      %p195 = scmp.eq.s32.totalorder %s18, 15
      %p196 = por %p194, %p195
      %p197 = scmp.ne.s32.totalorder %s186, %s187
      %p198 = scmp.eq.s32.totalorder %s18, 0
      %p199 = por %p197, %p198
      %p200 = scmp.ne.s32.totalorder %s186, %s187
      %p201 = scmp.eq.s32.totalorder %s19, 15
      %p202 = por %p200, %p201
      %p204 = scmp.ne.s32.totalorder %s187, %s203
      %p205 = scmp.eq.s32.totalorder %s19, 0
      %p206 = por %p204, %p205
      %p207 = scmp.le.s32.totalorder 1, %s13
      %p208 = scmp.lt.s32.totalorder %s13, 17
      %p209 = pnand %p207, %p208
      %p210 = pneg %p209
      // Predicated region
      $region9: #{irrelevant_learner_forward.2} parent=5 // pred_check
        _
      $region10: #{irrelevant_learner_forward.2} parent=5 // pred_check_branch
        %212 = sbr.rel (%p209) target = $region12
      $region11: #{irrelevant_learner_forward.2} parent=5 // pred_region
        %s213 = ssub.s32 %s13, 1
        // Predicated region
        $region13: #{irrelevant_learner_forward.2} parent=11 // pred_check
          %p214 = pneg %p100
        $region14: #{irrelevant_learner_forward.2} parent=11 // pred_check_branch
          %216 = sbr.rel (%p214) target = $region16
        $region15: #{irrelevant_learner_forward.2} parent=11 // pred_region
          _
        $region16: #{irrelevant_learner_forward.2} parent=11 // pred_fallthru
          _
        // Predicated region
        $region17: #{irrelevant_learner_forward.2} parent=11 // pred_check
          %p217 = pneg %p121
        $region18: #{irrelevant_learner_forward.2} parent=11 // pred_check_branch
          %219 = sbr.rel (%p217) target = $region20
        $region19: #{irrelevant_learner_forward.2} parent=11 // pred_region
          _
        $region20: #{irrelevant_learner_forward.2} parent=11 // pred_fallthru
          _
      $region12: #{irrelevant_learner_forward.2} parent=5 // pred_fallthru
        _
      %p220 = scmp.lt.s32.totalorder %s13, 16
      // Predicated region
      $region21: #{irrelevant_learner_forward.2} parent=5 // pred_check
        %p221 = pneg %p220
      $region22: #{irrelevant_learner_forward.2} parent=5 // pred_check_branch
        %223 = sbr.rel (%p221) target = $region24
      $region23: #{irrelevant_learner_forward.2} parent=5 // pred_region
        // Predicated region
        $region25: #{irrelevant_learner_forward.2} parent=23 // pred_check
          %p224 = pneg %p47
        $region26: #{irrelevant_learner_forward.2} parent=23 // pred_check_branch
          %226 = sbr.rel (%p224) target = $region28
        $region27: #{irrelevant_learner_forward.2} parent=23 // pred_region
          %s227 = sand.u32 %s37, 1
          %s228 = sand.u32 %s37, 1
          %s229 = smul.addr %s228, 64
          %s230 = scalar_lea.vmem [#allocation3], %s229
          %s231 = smul.u32 16, %s20
          %s232 = smul.addr %s231, 4
          %s233 = sadd.s32 %s21, %s232
          %s234 = smul.addr %s233, 4
          %s235 = scalar_lea.vmem %s0, %s234
          // Predicated region
          $region29: #{irrelevant_learner_forward.2} parent=27 // pred_check
            _
          $region30: #{irrelevant_learner_forward.2} parent=27 // pred_check_branch
            %237 = sbr.rel (0) target = $region32
          $region31: #{irrelevant_learner_forward.2} parent=27 // pred_region
            // Predicated region
            $region33: #{irrelevant_learner_forward.2} parent=31 // pred_check
              _
            $region34: #{irrelevant_learner_forward.2} parent=31 // pred_check_branch
              %239 = sbr.rel target = $region36
            $region35: #{irrelevant_learner_forward.2} parent=31 // pred_region
              // Predicated region
              $region48: #{irrelevant_learner_forward.2} parent=35 // pred_check
                _
              $region49: #{irrelevant_learner_forward.2} parent=35 // pred_check_branch
                %284 = sbr.rel (0) target = $region51
              $region50: #{irrelevant_learner_forward.2} parent=35 // pred_region
                loop: start=0, step=1, limit=1
                $region52: #{irrelevant_learner_forward.2} parent=50 // loop_pre_header
                  _
                $region53: #{irrelevant_learner_forward.2} parent=50 // loop_header
                  %s286 = sphi 0, %s290
                  %p287 = scmp.ge.s32.totalorder %s286, 1
                  %s291 = sphi %s235, %s235
                  %s292 = sphi %s230, %s230
                $region54: #{irrelevant_learner_forward.2} parent=50 // loop_header_branch
                  %289 = sbr.rel (%p287) target = $region58
                $region55: #{irrelevant_learner_forward.2} parent=50 // loop_body
                  _
                $region56: #{irrelevant_learner_forward.2} parent=50 // loop_footer
                  %s290 = sadd.s32 1, %s286
                $region57: #{irrelevant_learner_forward.2} parent=50 // loop_footer_branch
                  %285 = sbr.rel target = $region53
                $region58: #{irrelevant_learner_forward.2} parent=50 // loop_exit
                  _
                loop: start=0, step=1, limit=1
                $region59: #{irrelevant_learner_forward.2} parent=50 // loop_pre_header
                  _
                $region60: #{irrelevant_learner_forward.2} parent=50 // loop_header
                  %s295 = sphi 0, %s299
                  %p296 = scmp.ge.s32.totalorder %s295, 1
                  %s300 = sphi %s235, %s235
                  %s301 = sphi %s230, %s230
                $region61: #{irrelevant_learner_forward.2} parent=50 // loop_header_branch
                  %298 = sbr.rel (%p296) target = $region65
                $region62: #{irrelevant_learner_forward.2} parent=50 // loop_body
                  %v302 = vld [vmem:[%s300] sm:$0xf]
                  %303 = vst [vmem:[%s301] sm:$0xf] %v302
                  %v304 = vld [vmem:[%s300 + $0x10] sm:$0xf]
                  %305 = vst [vmem:[%s301 + $0x4] sm:$0xf] %v304
                  %v306 = vld [vmem:[%s300 + $0x20] sm:$0xf]
                  %307 = vst [vmem:[%s301 + $0x8] sm:$0xf] %v306
                  %v308 = vld [vmem:[%s300 + $0x30] sm:$0xf]
                  %309 = vst [vmem:[%s301 + $0xc] sm:$0xf] %v308
                  %v310 = vld [vmem:[%s300 + $0x40] sm:$0xf]
                  %311 = vst [vmem:[%s301 + $0x10] sm:$0xf] %v310
                  %v312 = vld [vmem:[%s300 + $0x50] sm:$0xf]
                  %313 = vst [vmem:[%s301 + $0x14] sm:$0xf] %v312
                  %v314 = vld [vmem:[%s300 + $0x60] sm:$0xf]
                  %315 = vst [vmem:[%s301 + $0x18] sm:$0xf] %v314
                  %v316 = vld [vmem:[%s300 + $0x70] sm:$0xf]
                  %317 = vst [vmem:[%s301 + $0x1c] sm:$0xf] %v316
                  %v318 = vld [vmem:[%s300 + $0x80] sm:$0xf]
                  %319 = vst [vmem:[%s301 + $0x20] sm:$0xf] %v318
                  %v320 = vld [vmem:[%s300 + $0x90] sm:$0xf]
                  %321 = vst [vmem:[%s301 + $0x24] sm:$0xf] %v320
                  %v322 = vld [vmem:[%s300 + $0xa0] sm:$0xf]
                  %323 = vst [vmem:[%s301 + $0x28] sm:$0xf] %v322
                  %v324 = vld [vmem:[%s300 + $0xb0] sm:$0xf]
                  %325 = vst [vmem:[%s301 + $0x2c] sm:$0xf] %v324
                  %v326 = vld [vmem:[%s300 + $0xc0] sm:$0xf]
                  %327 = vst [vmem:[%s301 + $0x30] sm:$0xf] %v326
                  %v328 = vld [vmem:[%s300 + $0xd0] sm:$0xf]
                  %329 = vst [vmem:[%s301 + $0x34] sm:$0xf] %v328
                  %v330 = vld [vmem:[%s300 + $0xe0] sm:$0xf]
                  %331 = vst [vmem:[%s301 + $0x38] sm:$0xf] %v330
                  %v332 = vld [vmem:[%s300 + $0xf0] sm:$0xf]
                  %333 = vst [vmem:[%s301 + $0x3c] sm:$0xf] %v332
                $region63: #{irrelevant_learner_forward.2} parent=50 // loop_footer
                  %s299 = sadd.s32 1, %s295
                $region64: #{irrelevant_learner_forward.2} parent=50 // loop_footer_branch
                  %294 = sbr.rel target = $region60
                $region65: #{irrelevant_learner_forward.2} parent=50 // loop_exit
                  _
              $region51: #{irrelevant_learner_forward.2} parent=35 // pred_fallthru
                _
            $region36: #{irrelevant_learner_forward.2} parent=31 // pred_fallthru
              _
            // Predicated region
            $region37: #{irrelevant_learner_forward.2} parent=31 // pred_check
              _
            $region38: #{irrelevant_learner_forward.2} parent=31 // pred_check_branch
              %241 = sbr.rel (0) target = $region40
            $region39: #{irrelevant_learner_forward.2} parent=31 // pred_region
              loop: start=0, step=1, limit=1
              $region41: #{irrelevant_learner_forward.2} parent=39 // loop_pre_header
                _
              $region42: #{irrelevant_learner_forward.2} parent=39 // loop_header
                %s244 = sphi 0, %s248
                %p245 = scmp.ge.s32.totalorder %s244, 1
                %s249 = sphi %s235, %s235
                %s250 = sphi %s230, %s230
              $region43: #{irrelevant_learner_forward.2} parent=39 // loop_header_branch
                %247 = sbr.rel (%p245) target = $region47
              $region44: #{irrelevant_learner_forward.2} parent=39 // loop_body
                %v251 = vld [vmem:[%s249] sm:$0xf]
                %252 = vst [vmem:[%s250] sm:$0xf] %v251
                %v253 = vld [vmem:[%s249 + $0x10] sm:$0xf]
                %254 = vst [vmem:[%s250 + $0x4] sm:$0xf] %v253
                %v255 = vld [vmem:[%s249 + $0x20] sm:$0xf]
                %256 = vst [vmem:[%s250 + $0x8] sm:$0xf] %v255
                %v257 = vld [vmem:[%s249 + $0x30] sm:$0xf]
                %258 = vst [vmem:[%s250 + $0xc] sm:$0xf] %v257
                %v259 = vld [vmem:[%s249 + $0x40] sm:$0xf]
                %260 = vst [vmem:[%s250 + $0x10] sm:$0xf] %v259
                %v261 = vld [vmem:[%s249 + $0x50] sm:$0xf]
                %262 = vst [vmem:[%s250 + $0x14] sm:$0xf] %v261
                %v263 = vld [vmem:[%s249 + $0x60] sm:$0xf]
                %264 = vst [vmem:[%s250 + $0x18] sm:$0xf] %v263
                %v265 = vld [vmem:[%s249 + $0x70] sm:$0xf]
                %266 = vst [vmem:[%s250 + $0x1c] sm:$0xf] %v265
                %v267 = vld [vmem:[%s249 + $0x80] sm:$0xf]
                %268 = vst [vmem:[%s250 + $0x20] sm:$0xf] %v267
                %v269 = vld [vmem:[%s249 + $0x90] sm:$0xf]
                %270 = vst [vmem:[%s250 + $0x24] sm:$0xf] %v269
                %v271 = vld [vmem:[%s249 + $0xa0] sm:$0xf]
                %272 = vst [vmem:[%s250 + $0x28] sm:$0xf] %v271
                %v273 = vld [vmem:[%s249 + $0xb0] sm:$0xf]
                %274 = vst [vmem:[%s250 + $0x2c] sm:$0xf] %v273
                %v275 = vld [vmem:[%s249 + $0xc0] sm:$0xf]
                %276 = vst [vmem:[%s250 + $0x30] sm:$0xf] %v275
                %v277 = vld [vmem:[%s249 + $0xd0] sm:$0xf]
                %278 = vst [vmem:[%s250 + $0x34] sm:$0xf] %v277
                %v279 = vld [vmem:[%s249 + $0xe0] sm:$0xf]
                %280 = vst [vmem:[%s250 + $0x38] sm:$0xf] %v279
                %v281 = vld [vmem:[%s249 + $0xf0] sm:$0xf]
                %282 = vst [vmem:[%s250 + $0x3c] sm:$0xf] %v281
              $region45: #{irrelevant_learner_forward.2} parent=39 // loop_footer
                %s248 = sadd.s32 1, %s244
              $region46: #{irrelevant_learner_forward.2} parent=39 // loop_footer_branch
                %243 = sbr.rel target = $region42
              $region47: #{irrelevant_learner_forward.2} parent=39 // loop_exit
                _
            $region40: #{irrelevant_learner_forward.2} parent=31 // pred_fallthru
              _
          $region32: #{irrelevant_learner_forward.2} parent=27 // pred_fallthru
            _
          %334 = vnop
        $region28: #{irrelevant_learner_forward.2} parent=23 // pred_fallthru
          _
        // Predicated region
        $region66: #{irrelevant_learner_forward.2} parent=23 // pred_check
          %p335 = pneg %p73
        $region67: #{irrelevant_learner_forward.2} parent=23 // pred_check_branch
          %337 = sbr.rel (%p335) target = $region69
        $region68: #{irrelevant_learner_forward.2} parent=23 // pred_region
          %s338 = smul.u32 16, %s21
          %p339 = scmp.lt.s32.totalorder %s338, 63
          %s340 = scalar_select %p339, %s338, 63
          %s341 = smul.addr %s340, 4
          %s342 = scalar_lea.vmem %s1, %s341
          %s343 = smul.u32 16, %s21
        $region69: #{irrelevant_learner_forward.2} parent=23 // pred_fallthru
          _
      $region24: #{irrelevant_learner_forward.2} parent=5 // pred_fallthru
        _
      %p344 = scmp.le.s32.totalorder 1, %s13
      %p345 = scmp.lt.s32.totalorder %s13, 17
      %p346 = pnand %p344, %p345
      %p347 = pneg %p346
      // Predicated region
      $region70: #{irrelevant_learner_forward.2} parent=5 // pred_check
        _
      $region71: #{irrelevant_learner_forward.2} parent=5 // pred_check_branch
        %349 = sbr.rel (%p346) target = $region73
      $region72: #{irrelevant_learner_forward.2} parent=5 // pred_region
        %s350 = ssub.s32 %s13, 1
        %s351 = sand.u32 %s40, 1
        %s352 = sand.u32 %s40, 1
        %s353 = smul.addr %s352, 64
        %s354 = scalar_lea.vmem [#allocation3], %s353
        // Predicated region
        $region74: #{irrelevant_learner_forward.2} parent=72 // pred_check
          %p355 = pneg %p53
        $region75: #{irrelevant_learner_forward.2} parent=72 // pred_check_branch
          %357 = sbr.rel (%p355) target = $region77
        $region76: #{irrelevant_learner_forward.2} parent=72 // pred_region
          _
        $region77: #{irrelevant_learner_forward.2} parent=72 // pred_fallthru
          _
        %s358 = sand.u32 %s40, 1
        %s359 = sand.u32 %s40, 1
        %s360 = smul.addr %s359, 64
        %s361 = scalar_lea.vmem [#allocation3], %s360
        %p362 = pneg %p53
        %p363 = pneg %p50
        %s364 = smul.u32 16, %s23
        %p365 = scmp.lt.s32.totalorder %s364, 63
        %s366 = scalar_select %p365, %s364, 63
        %s367 = smul.addr %s366, 4
        %s368 = scalar_lea.vmem %s1, %s367
        %p369 = pneg %p79
        %p370 = pneg %p76
        %p371 = pneg %p100
        %p372 = pneg %p97
        %p373 = pneg %p121
        %p374 = pneg %p118
        %p375 = pneg %p147
        %p376 = pneg %p144
        %s377 = smul.u32 16, %s22
        %p378 = scmp.lt.s32.totalorder %s377, 63
        %s379 = scalar_select %p378, %s377, 63
        %s380 = smul.addr %s379, 4
        %s381 = scalar_lea.vmem %s4, %s380
        %p382 = pneg %p173
        %p383 = pneg %p170
        %p384 = scmp.lt.s32.totalorder %s22, 3
        %s385 = scalar_select %p384, %s22, 3
        %s386 = scalar_lea.vmem %s5, %s385
        %p387 = pneg %p199
        %p388 = pneg %p196
        %p389 = scmp.lt.s32.totalorder %s22, 3
        %s390 = scalar_select %p389, %s22, 3
        %s391 = scalar_lea.vmem %s6, %s390
        %s392 = smul.u32 16, %s22
        %s393 = smul.u32 16, %s23
        %p394 = scmp.lt.s32.totalorder %s393, 63
        %s395 = scalar_select %p394, %s393, 63
        %s396 = smul.addr %s395, 4
        %s397 = scalar_lea.vmem %s1, %s396
        %s398 = smul.u32 16, %s23
        %s399 = smul.u32 16, %s22
        %p400 = scmp.lt.s32.totalorder %s399, 63
        %s401 = scalar_select %p400, %s399, 63
        %s402 = smul.addr %s401, 4
        %s403 = scalar_lea.vmem %s4, %s402
        %s404 = smul.u32 16, %s22
        %p405 = scmp.lt.s32.totalorder %s22, 3
        %s406 = scalar_select %p405, %s22, 3
        %s407 = scalar_lea.vmem %s5, %s406
        %p408 = scmp.lt.s32.totalorder %s22, 3
        %s409 = scalar_select %p408, %s22, 3
        %s410 = scalar_lea.vmem %s6, %s409
        %s412 = smul.u32 %s22, 128
        %p413 = scmp.eq.s32.totalorder %s23, 0
        // Predicated region
        $region78: #{irrelevant_learner_forward.2} parent=72 // pred_check
          %p414 = pneg %p413
        $region79: #{irrelevant_learner_forward.2} parent=72 // pred_check_branch
          %416 = sbr.rel (%p414) target = $region81
        $region80: #{irrelevant_learner_forward.2} parent=72 // pred_region
          %417 = vst [vmem:[#allocation2] sm:$0xff] 0.0
          %418 = vst [vmem:[#allocation2 + $0x8] sm:$0xff] 0.0
          %419 = vst [vmem:[#allocation2 + $0x10] sm:$0xff] 0.0
          %420 = vst [vmem:[#allocation2 + $0x18] sm:$0xff] 0.0
          %421 = vst [vmem:[#allocation2 + $0x20] sm:$0xff] 0.0
          %422 = vst [vmem:[#allocation2 + $0x28] sm:$0xff] 0.0
          %423 = vst [vmem:[#allocation2 + $0x30] sm:$0xff] 0.0
          %424 = vst [vmem:[#allocation2 + $0x38] sm:$0xff] 0.0
          %425 = vst [vmem:[#allocation2 + $0x40] sm:$0xff] 0.0
          %426 = vst [vmem:[#allocation2 + $0x48] sm:$0xff] 0.0
          %427 = vst [vmem:[#allocation2 + $0x50] sm:$0xff] 0.0
          %428 = vst [vmem:[#allocation2 + $0x58] sm:$0xff] 0.0
          %429 = vst [vmem:[#allocation2 + $0x60] sm:$0xff] 0.0
          %430 = vst [vmem:[#allocation2 + $0x68] sm:$0xff] 0.0
          %431 = vst [vmem:[#allocation2 + $0x70] sm:$0xff] 0.0
          %432 = vst [vmem:[#allocation2 + $0x78] sm:$0xff] 0.0
        $region81: #{irrelevant_learner_forward.2} parent=72 // pred_fallthru
          _
        %v433 = vld [vmem:[#allocation2] sm:$0xff]
        %v434 = vld [vmem:[#allocation2 + $0x8] sm:$0xff]
        %v435 = vld [vmem:[#allocation2 + $0x10] sm:$0xff]
        %v436 = vld [vmem:[#allocation2 + $0x18] sm:$0xff]
        %v437 = vld [vmem:[#allocation2 + $0x20] sm:$0xff]
        %v438 = vld [vmem:[#allocation2 + $0x28] sm:$0xff]
        %v439 = vld [vmem:[#allocation2 + $0x30] sm:$0xff]
        %v440 = vld [vmem:[#allocation2 + $0x38] sm:$0xff]
        %v441 = vld [vmem:[#allocation2 + $0x40] sm:$0xff]
        %v442 = vld [vmem:[#allocation2 + $0x48] sm:$0xff]
        %v443 = vld [vmem:[#allocation2 + $0x50] sm:$0xff]
        %v444 = vld [vmem:[#allocation2 + $0x58] sm:$0xff]
        %v445 = vld [vmem:[#allocation2 + $0x60] sm:$0xff]
        %v446 = vld [vmem:[#allocation2 + $0x68] sm:$0xff]
        %v447 = vld [vmem:[#allocation2 + $0x70] sm:$0xff]
        %v448 = vld [vmem:[#allocation2 + $0x78] sm:$0xff]
        %v449 = vld [vmem:[%s354] sm:$0xf]
        %v450 = vld [vmem:[%s354 + $0x4] sm:$0xf]
        %v451 = vld [vmem:[%s354 + $0x8] sm:$0xf]
        %v452 = vld [vmem:[%s354 + $0xc] sm:$0xf]
        %v453 = vld [vmem:[%s354 + $0x10] sm:$0xf]
        %v454 = vld [vmem:[%s354 + $0x14] sm:$0xf]
        %v455 = vld [vmem:[%s354 + $0x18] sm:$0xf]
        %v456 = vld [vmem:[%s354 + $0x1c] sm:$0xf]
        %v457 = vld [vmem:[%s354 + $0x20] sm:$0xf]
        %v458 = vld [vmem:[%s354 + $0x24] sm:$0xf]
        %v459 = vld [vmem:[%s354 + $0x28] sm:$0xf]
        %v460 = vld [vmem:[%s354 + $0x2c] sm:$0xf]
        %v461 = vld [vmem:[%s354 + $0x30] sm:$0xf]
        %v462 = vld [vmem:[%s354 + $0x34] sm:$0xf]
        %v463 = vld [vmem:[%s354 + $0x38] sm:$0xf]
        %v464 = vld [vmem:[%s354 + $0x3c] sm:$0xf]
        %v465 = vld [vmem:[%s397] sm:$0xf]
        %v466 = vld [vmem:[%s397 + $0x4] sm:$0xf]
        %v467 = vld [vmem:[%s397 + $0x8] sm:$0xf]
        %v468 = vld [vmem:[%s397 + $0xc] sm:$0xf]
        %v469 = vld [vmem:[%s397 + $0x10] sm:$0xf]
        %v470 = vld [vmem:[%s397 + $0x14] sm:$0xf]
        %v471 = vld [vmem:[%s397 + $0x18] sm:$0xf]
        %v472 = vld [vmem:[%s397 + $0x1c] sm:$0xf]
        %v473 = vld [vmem:[%s397 + $0x20] sm:$0xf]
        %v474 = vld [vmem:[%s397 + $0x24] sm:$0xf]
        %v475 = vld [vmem:[%s397 + $0x28] sm:$0xf]
        %v476 = vld [vmem:[%s397 + $0x2c] sm:$0xf]
        %v477 = vld [vmem:[%s397 + $0x30] sm:$0xf]
        %v478 = vld [vmem:[%s397 + $0x34] sm:$0xf]
        %v479 = vld [vmem:[%s397 + $0x38] sm:$0xf]
        %v480 = vld [vmem:[%s397 + $0x3c] sm:$0xf]
        %v497 = vunpack.c.l.b16 %v449
        %v498 = vunpack.c.l.b16 %v450
        %v499 = vunpack.c.l.b16 %v451
        %v500 = vunpack.c.l.b16 %v452
        %v501 = vunpack.c.l.b16 %v453
        %v502 = vunpack.c.l.b16 %v454
        %v503 = vunpack.c.l.b16 %v455
        %v504 = vunpack.c.l.b16 %v456
        %v505 = vunpack.c.l.b16 %v457
        %v506 = vunpack.c.l.b16 %v458
        %v507 = vunpack.c.l.b16 %v459
        %v508 = vunpack.c.l.b16 %v460
        %v509 = vunpack.c.l.b16 %v461
        %v510 = vunpack.c.l.b16 %v462
        %v511 = vunpack.c.l.b16 %v463
        %v512 = vunpack.c.l.b16 %v464
        %v513 = vpack.c.b16 %v498, %v497
        %v514 = vpack.c.b16 %v500, %v499
        %v515 = vpack.c.b16 %v502, %v501
        %v516 = vpack.c.b16 %v504, %v503
        %v517 = vpack.c.b16 %v506, %v505
        %v518 = vpack.c.b16 %v508, %v507
        %v519 = vpack.c.b16 %v510, %v509
        %v520 = vpack.c.b16 %v512, %v511
        %v545 = vunpack.c.l.b16 %v465
        %v546 = vunpack.c.l.b16 %v466
        %v547 = vunpack.c.l.b16 %v467
        %v548 = vunpack.c.l.b16 %v468
        %v549 = vunpack.c.l.b16 %v469
        %v550 = vunpack.c.l.b16 %v470
        %v551 = vunpack.c.l.b16 %v471
        %v552 = vunpack.c.l.b16 %v472
        %v553 = vunpack.c.l.b16 %v473
        %v554 = vunpack.c.l.b16 %v474
        %v555 = vunpack.c.l.b16 %v475
        %v556 = vunpack.c.l.b16 %v476
        %v557 = vunpack.c.l.b16 %v477
        %v558 = vunpack.c.l.b16 %v478
        %v559 = vunpack.c.l.b16 %v479
        %v560 = vunpack.c.l.b16 %v480
        %v561 = vpack.c.b16 %v546, %v545
        %v562 = vpack.c.b16 %v548, %v547
        %v563 = vpack.c.b16 %v550, %v549
        %v564 = vpack.c.b16 %v552, %v551
        %v565 = vpack.c.b16 %v554, %v553
        %v566 = vpack.c.b16 %v556, %v555
        %v567 = vpack.c.b16 %v558, %v557
        %v568 = vpack.c.b16 %v560, %v559
        %577 = vmatprep.subr.bf16.mxu0 0
        %578 = vmatpush1.bf16.msra.mxu0 %v561
        %579 = vmatprep.subr.bf16.mxu0 0
        %580 = vmatpush1.bf16.msra.mxu0 %v562
        %581 = vmatprep.subr.bf16.mxu0 0
        %582 = vmatpush1.bf16.msra.mxu0 %v563
        %583 = vmatprep.subr.bf16.mxu0 0
        %584 = vmatpush1.bf16.msra.mxu0 %v564
        %585 = vmatprep.subr.bf16.mxu0 0
        %586 = vmatpush1.bf16.msra.mxu0 %v565
        %587 = vmatprep.subr.bf16.mxu0 0
        %588 = vmatpush1.bf16.msra.mxu0 %v566
        %589 = vmatprep.subr.bf16.mxu0 0
        %590 = vmatpush1.bf16.msra.mxu0 %v567
        %591 = vmatprep.subr.bf16.mxu0 0
        %592 = vmatpush1.bf16.msra.mxu0 %v568
        %593 = vmatprep.subr.bf16.mxu0 0
        %594 = vmatpush1.bf16.msra.mxu0 0
        %595 = vmatprep.subr.bf16.mxu0 0
        %596 = vmatpush1.bf16.msra.mxu0 0
        %597 = vmatprep.subr.bf16.mxu0 0
        %598 = vmatpush1.bf16.msra.mxu0 0
        %599 = vmatprep.subr.bf16.mxu0 0
        %600 = vmatpush1.bf16.msra.mxu0 0
        %601 = vmatprep.subr.bf16.mxu0 0
        %602 = vmatpush1.bf16.msra.mxu0 0
        %603 = vmatprep.subr.bf16.mxu0 0
        %604 = vmatpush1.bf16.msra.mxu0 0
        %605 = vmatprep.subr.bf16.mxu0 0
        %606 = vmatpush1.bf16.msra.mxu0 0
        %607 = vmatprep.subr.bf16.mxu0 0
        %608 = vmatpush1.bf16.msra.mxu0 0
        %609 = vmatprep.mubr.bf16.mxu0 0
        %610 = vmatmul.mubr.bf16.gmra.mrb[0].mxu0 %v513
        %v611 = vpop.f32.mrb[0].mxu0
        %v612 = vadd.f32 0.0, %v611
        %v613 = vpop.f32.mrb[0].mxu0
        %v614 = vpop.f32.mrb[0].mxu0
        %v615 = vadd.f32 0.0, %v614
        %v616 = vpop.f32.mrb[0].mxu0
        %617 = vmatprep.mubr.bf16.mxu0 0
        %618 = vmatmul.mubr.bf16.gmra.mrb[0].mxu0 %v514
        %v619 = vpop.f32.mrb[0].mxu0
        %v620 = vadd.f32 0.0, %v619
        %v621 = vpop.f32.mrb[0].mxu0
        %v622 = vpop.f32.mrb[0].mxu0
        %v623 = vadd.f32 0.0, %v622
        %v624 = vpop.f32.mrb[0].mxu0
        %625 = vmatprep.mubr.bf16.mxu0 0
        %626 = vmatmul.mubr.bf16.gmra.mrb[0].mxu0 %v515
        %v627 = vpop.f32.mrb[0].mxu0
        %v628 = vadd.f32 0.0, %v627
        %v629 = vpop.f32.mrb[0].mxu0
        %v630 = vpop.f32.mrb[0].mxu0
        %v631 = vadd.f32 0.0, %v630
        %v632 = vpop.f32.mrb[0].mxu0
        %633 = vmatprep.mubr.bf16.mxu0 0
        %634 = vmatmul.mubr.bf16.gmra.mrb[0].mxu0 %v516
        %v635 = vpop.f32.mrb[0].mxu0
        %v636 = vadd.f32 0.0, %v635
        %v637 = vpop.f32.mrb[0].mxu0
        %v638 = vpop.f32.mrb[0].mxu0
        %v639 = vadd.f32 0.0, %v638
        %v640 = vpop.f32.mrb[0].mxu0
        %641 = vmatprep.mubr.bf16.mxu0 0
        %642 = vmatmul.mubr.bf16.gmra.mrb[0].mxu0 %v517
        %v643 = vpop.f32.mrb[0].mxu0
        %v644 = vadd.f32 0.0, %v643
        %v645 = vpop.f32.mrb[0].mxu0
        %v646 = vpop.f32.mrb[0].mxu0
        %v647 = vadd.f32 0.0, %v646
        %v648 = vpop.f32.mrb[0].mxu0
        %649 = vmatprep.mubr.bf16.mxu0 0
        %650 = vmatmul.mubr.bf16.gmra.mrb[0].mxu0 %v518
        %v651 = vpop.f32.mrb[0].mxu0
        %v652 = vadd.f32 0.0, %v651
        %v653 = vpop.f32.mrb[0].mxu0
        %v654 = vpop.f32.mrb[0].mxu0
        %v655 = vadd.f32 0.0, %v654
        %v656 = vpop.f32.mrb[0].mxu0
        %657 = vmatprep.mubr.bf16.mxu0 0
        %658 = vmatmul.mubr.bf16.gmra.mrb[0].mxu0 %v519
        %v659 = vpop.f32.mrb[0].mxu0
        %v660 = vadd.f32 0.0, %v659
        %v661 = vpop.f32.mrb[0].mxu0
        %v662 = vpop.f32.mrb[0].mxu0
        %v663 = vadd.f32 0.0, %v662
        %v664 = vpop.f32.mrb[0].mxu0
        %665 = vmatprep.mubr.bf16.mxu0 0
        %666 = vmatmul.mubr.bf16.gmra.mrb[0].mxu0 %v520
        %v667 = vpop.f32.mrb[0].mxu0
        %v668 = vadd.f32 0.0, %v667
        %v669 = vpop.f32.mrb[0].mxu0
        %v670 = vpop.f32.mrb[0].mxu0
        %v671 = vadd.f32 0.0, %v670
        %v672 = vpop.f32.mrb[0].mxu0
        %673 = vdwg.mxu0
        %v674 = vadd.f32 %v433, %v612
        %v675 = vadd.f32 %v434, %v615
        %v676 = vadd.f32 %v435, %v620
        %v677 = vadd.f32 %v436, %v623
        %v678 = vadd.f32 %v437, %v628
        %v679 = vadd.f32 %v438, %v631
        %v680 = vadd.f32 %v439, %v636
        %v681 = vadd.f32 %v440, %v639
        %v682 = vadd.f32 %v441, %v644
        %v683 = vadd.f32 %v442, %v647
        %v684 = vadd.f32 %v443, %v652
        %v685 = vadd.f32 %v444, %v655
        %v686 = vadd.f32 %v445, %v660
        %v687 = vadd.f32 %v446, %v663
        %v688 = vadd.f32 %v447, %v668
        %v689 = vadd.f32 %v448, %v671
        %690 = vst [vmem:[#allocation2] sm:$0xff] %v674
        %691 = vst [vmem:[#allocation2 + $0x8] sm:$0xff] %v675
        %692 = vst [vmem:[#allocation2 + $0x10] sm:$0xff] %v676
        %693 = vst [vmem:[#allocation2 + $0x18] sm:$0xff] %v677
        %694 = vst [vmem:[#allocation2 + $0x20] sm:$0xff] %v678
        %695 = vst [vmem:[#allocation2 + $0x28] sm:$0xff] %v679
        %696 = vst [vmem:[#allocation2 + $0x30] sm:$0xff] %v680
        %697 = vst [vmem:[#allocation2 + $0x38] sm:$0xff] %v681
        %698 = vst [vmem:[#allocation2 + $0x40] sm:$0xff] %v682
        %699 = vst [vmem:[#allocation2 + $0x48] sm:$0xff] %v683
        %700 = vst [vmem:[#allocation2 + $0x50] sm:$0xff] %v684
        %701 = vst [vmem:[#allocation2 + $0x58] sm:$0xff] %v685
        %702 = vst [vmem:[#allocation2 + $0x60] sm:$0xff] %v686
        %703 = vst [vmem:[#allocation2 + $0x68] sm:$0xff] %v687
        %704 = vst [vmem:[#allocation2 + $0x70] sm:$0xff] %v688
        %705 = vst [vmem:[#allocation2 + $0x78] sm:$0xff] %v689
        %p706 = scmp.eq.s32.totalorder %s23, 3
        // Predicated region
        $region82: #{irrelevant_learner_forward.2} parent=72 // pred_check
          %p707 = pneg %p706
        $region83: #{irrelevant_learner_forward.2} parent=72 // pred_check_branch
          %709 = sbr.rel (%p707) target = $region85
        $region84: #{irrelevant_learner_forward.2} parent=72 // pred_region
          %v710 = vld [vmem:[#allocation2] sm:$0xff]
          %v711 = vld [vmem:[#allocation2 + $0x8] sm:$0xff]
          %v712 = vld [vmem:[#allocation2 + $0x10] sm:$0xff]
          %v713 = vld [vmem:[#allocation2 + $0x18] sm:$0xff]
          %v714 = vld [vmem:[#allocation2 + $0x20] sm:$0xff]
          %v715 = vld [vmem:[#allocation2 + $0x28] sm:$0xff]
          %v716 = vld [vmem:[#allocation2 + $0x30] sm:$0xff]
          %v717 = vld [vmem:[#allocation2 + $0x38] sm:$0xff]
          %v718 = vld [vmem:[#allocation2 + $0x40] sm:$0xff]
          %v719 = vld [vmem:[#allocation2 + $0x48] sm:$0xff]
          %v720 = vld [vmem:[#allocation2 + $0x50] sm:$0xff]
          %v721 = vld [vmem:[#allocation2 + $0x58] sm:$0xff]
          %v722 = vld [vmem:[#allocation2 + $0x60] sm:$0xff]
          %v723 = vld [vmem:[#allocation2 + $0x68] sm:$0xff]
          %v724 = vld [vmem:[#allocation2 + $0x70] sm:$0xff]
          %v725 = vld [vmem:[#allocation2 + $0x78] sm:$0xff]
          %v726 = vpack.c.bf16 %v711, %v710
          %v727 = vpack.c.bf16 %v713, %v712
          %v728 = vpack.c.bf16 %v715, %v714
          %v729 = vpack.c.bf16 %v717, %v716
          %v730 = vpack.c.bf16 %v719, %v718
          %v731 = vpack.c.bf16 %v721, %v720
          %v732 = vpack.c.bf16 %v723, %v722
          %v733 = vpack.c.bf16 %v725, %v724
          %v734 = vld [vmem:[%s2] sm:$0xf]
          %v735 = vld [vmem:[%s2 + $0x4] sm:$0xf]
          %v736 = vld [vmem:[%s2 + $0x8] sm:$0xf]
          %v737 = vld [vmem:[%s2 + $0xc] sm:$0xf]
          %v738 = vld [vmem:[%s2 + $0x10] sm:$0xf]
          %v739 = vld [vmem:[%s2 + $0x14] sm:$0xf]
          %v740 = vld [vmem:[%s2 + $0x18] sm:$0xf]
          %v741 = vld [vmem:[%s2 + $0x1c] sm:$0xf]
          %v742 = vld [vmem:[%s2 + $0x20] sm:$0xf]
          %v743 = vld [vmem:[%s2 + $0x24] sm:$0xf]
          %v744 = vld [vmem:[%s2 + $0x28] sm:$0xf]
          %v745 = vld [vmem:[%s2 + $0x2c] sm:$0xf]
          %v746 = vld [vmem:[%s2 + $0x30] sm:$0xf]
          %v747 = vld [vmem:[%s2 + $0x34] sm:$0xf]
          %v748 = vld [vmem:[%s2 + $0x38] sm:$0xf]
          %v749 = vld [vmem:[%s2 + $0x3c] sm:$0xf]
          %v750 = vld [vmem:[%s3] sm:$0x1]
          %v752 = vlaneseq
          %v753 = vshrl.u32 %v752, 7
          %v754 = vsub.s32 0, %v753
          %v755 = vrot.slane %v750, %v754
          %v773 = vunpack.c.l.b16 %v734
          %v774 = vunpack.c.l.b16 %v735
          %v775 = vunpack.c.l.b16 %v736
          %v776 = vunpack.c.l.b16 %v737
          %v777 = vunpack.c.l.b16 %v738
          %v778 = vunpack.c.l.b16 %v739
          %v779 = vunpack.c.l.b16 %v740
          %v780 = vunpack.c.l.b16 %v741
          %v781 = vunpack.c.l.b16 %v742
          %v782 = vunpack.c.l.b16 %v743
          %v783 = vunpack.c.l.b16 %v744
          %v784 = vunpack.c.l.b16 %v745
          %v785 = vunpack.c.l.b16 %v746
          %v786 = vunpack.c.l.b16 %v747
          %v787 = vunpack.c.l.b16 %v748
          %v788 = vunpack.c.l.b16 %v749
          %v789 = vpack.c.b16 %v774, %v773
          %v790 = vpack.c.b16 %v776, %v775
          %v791 = vpack.c.b16 %v778, %v777
          %v792 = vpack.c.b16 %v780, %v779
          %v793 = vpack.c.b16 %v782, %v781
          %v794 = vpack.c.b16 %v784, %v783
          %v795 = vpack.c.b16 %v786, %v785
          %v796 = vpack.c.b16 %v788, %v787
          %805 = vmatprep.subr.bf16.mxu0 0
          %806 = vmatpush1.bf16.msra.mxu0 %v789
          %807 = vmatprep.subr.bf16.mxu0 0
          %808 = vmatpush1.bf16.msra.mxu0 %v790
          %809 = vmatprep.subr.bf16.mxu0 0
          %810 = vmatpush1.bf16.msra.mxu0 %v791
          %811 = vmatprep.subr.bf16.mxu0 0
          %812 = vmatpush1.bf16.msra.mxu0 %v792
          %813 = vmatprep.subr.bf16.mxu0 0
          %814 = vmatpush1.bf16.msra.mxu0 %v793
          %815 = vmatprep.subr.bf16.mxu0 0
          %816 = vmatpush1.bf16.msra.mxu0 %v794
          %817 = vmatprep.subr.bf16.mxu0 0
          %818 = vmatpush1.bf16.msra.mxu0 %v795
          %819 = vmatprep.subr.bf16.mxu0 0
          %820 = vmatpush1.bf16.msra.mxu0 %v796
          %821 = vmatprep.subr.bf16.mxu0 0
          %822 = vmatpush1.bf16.msra.mxu0 0
          %823 = vmatprep.subr.bf16.mxu0 0
          %824 = vmatpush1.bf16.msra.mxu0 0
          %825 = vmatprep.subr.bf16.mxu0 0
          %826 = vmatpush1.bf16.msra.mxu0 0
          %827 = vmatprep.subr.bf16.mxu0 0
          %828 = vmatpush1.bf16.msra.mxu0 0
          %829 = vmatprep.subr.bf16.mxu0 0
          %830 = vmatpush1.bf16.msra.mxu0 0
          %831 = vmatprep.subr.bf16.mxu0 0
          %832 = vmatpush1.bf16.msra.mxu0 0
          %833 = vmatprep.subr.bf16.mxu0 0
          %834 = vmatpush1.bf16.msra.mxu0 0
          %835 = vmatprep.subr.bf16.mxu0 0
          %836 = vmatpush1.bf16.msra.mxu0 0
          %837 = vmatprep.mubr.bf16.mxu0 0
          %838 = vmatmul.mubr.bf16.gmra.mrb[0].mxu0 %v726
          %v839 = vpop.f32.mrb[0].mxu0
          %v840 = vadd.f32 %v755, %v839
          %v841 = vpop.f32.mrb[0].mxu0
          %v842 = vpop.f32.mrb[0].mxu0
          %v843 = vadd.f32 %v755, %v842
          %v844 = vpop.f32.mrb[0].mxu0
          %845 = vmatprep.mubr.bf16.mxu0 0
          %846 = vmatmul.mubr.bf16.gmra.mrb[0].mxu0 %v727
          %v847 = vpop.f32.mrb[0].mxu0
          %v848 = vadd.f32 %v755, %v847
          %v849 = vpop.f32.mrb[0].mxu0
          %v850 = vpop.f32.mrb[0].mxu0
          %v851 = vadd.f32 %v755, %v850
          %v852 = vpop.f32.mrb[0].mxu0
          %853 = vmatprep.mubr.bf16.mxu0 0
          %854 = vmatmul.mubr.bf16.gmra.mrb[0].mxu0 %v728
          %v855 = vpop.f32.mrb[0].mxu0
          %v856 = vadd.f32 %v755, %v855
          %v857 = vpop.f32.mrb[0].mxu0
          %v858 = vpop.f32.mrb[0].mxu0
          %v859 = vadd.f32 %v755, %v858
          %v860 = vpop.f32.mrb[0].mxu0
          %861 = vmatprep.mubr.bf16.mxu0 0
          %862 = vmatmul.mubr.bf16.gmra.mrb[0].mxu0 %v729
          %v863 = vpop.f32.mrb[0].mxu0
          %v864 = vadd.f32 %v755, %v863
          %v865 = vpop.f32.mrb[0].mxu0
          %v866 = vpop.f32.mrb[0].mxu0
          %v867 = vadd.f32 %v755, %v866
          %v868 = vpop.f32.mrb[0].mxu0
          %869 = vmatprep.mubr.bf16.mxu0 0
          %870 = vmatmul.mubr.bf16.gmra.mrb[0].mxu0 %v730
          %v871 = vpop.f32.mrb[0].mxu0
          %v872 = vadd.f32 %v755, %v871
          %v873 = vpop.f32.mrb[0].mxu0
          %v874 = vpop.f32.mrb[0].mxu0
          %v875 = vadd.f32 %v755, %v874
          %v876 = vpop.f32.mrb[0].mxu0
          %877 = vmatprep.mubr.bf16.mxu0 0
          %878 = vmatmul.mubr.bf16.gmra.mrb[0].mxu0 %v731
          %v879 = vpop.f32.mrb[0].mxu0
          %v880 = vadd.f32 %v755, %v879
          %v881 = vpop.f32.mrb[0].mxu0
          %v882 = vpop.f32.mrb[0].mxu0
          %v883 = vadd.f32 %v755, %v882
          %v884 = vpop.f32.mrb[0].mxu0
          %885 = vmatprep.mubr.bf16.mxu0 0
          %886 = vmatmul.mubr.bf16.gmra.mrb[0].mxu0 %v732
          %v887 = vpop.f32.mrb[0].mxu0
          %v888 = vadd.f32 %v755, %v887
          %v889 = vpop.f32.mrb[0].mxu0
          %v890 = vpop.f32.mrb[0].mxu0
          %v891 = vadd.f32 %v755, %v890
          %v892 = vpop.f32.mrb[0].mxu0
          %893 = vmatprep.mubr.bf16.mxu0 0
          %894 = vmatmul.mubr.bf16.gmra.mrb[0].mxu0 %v733
          %v895 = vpop.f32.mrb[0].mxu0
          %v896 = vadd.f32 %v755, %v895
          %v897 = vpop.f32.mrb[0].mxu0
          %v898 = vpop.f32.mrb[0].mxu0
          %v899 = vadd.f32 %v755, %v898
          %v900 = vpop.f32.mrb[0].mxu0
          %901 = vdwg.mxu0
          %v902 = vlaneseq
          %v903 = vshrl.u32 %v902, 7
          %v904 = vadd.s32 %v903, 8
          %v905 = vadd.s32 %v903, 16
          %v906 = vadd.s32 %v903, 24
          %v907 = vadd.s32 %v903, 32
          %v908 = vadd.s32 %v903, 40
          %v909 = vadd.s32 %v903, 48
          %v910 = vadd.s32 %v903, 56
          %v911 = vadd.s32 %v903, 64
          %v912 = vadd.s32 %v903, 72
          %v913 = vadd.s32 %v903, 80
          %v914 = vadd.s32 %v903, 88
          %v915 = vadd.s32 %v903, 96
          %v916 = vadd.s32 %v903, 104
          %v917 = vadd.s32 %v903, 112
          %v918 = vadd.s32 %v903, 120
          %v919 = vstv %s412
          %v920 = vadd.s32 %v919, %v903
          %v921 = vadd.s32 %v919, %v904
          %v922 = vadd.s32 %v919, %v905
          %v923 = vadd.s32 %v919, %v906
          %v924 = vadd.s32 %v919, %v907
          %v925 = vadd.s32 %v919, %v908
          %v926 = vadd.s32 %v919, %v909
          %v927 = vadd.s32 %v919, %v910
          %v928 = vadd.s32 %v919, %v911
          %v929 = vadd.s32 %v919, %v912
          %v930 = vadd.s32 %v919, %v913
          %v931 = vadd.s32 %v919, %v914
          %v932 = vadd.s32 %v919, %v915
          %v933 = vadd.s32 %v919, %v916
          %v934 = vadd.s32 %v919, %v917
          %v935 = vadd.s32 %v919, %v918
          %vm936 = vcmp.lt.s32.totalorder %v920, 500
          %vm937 = vcmp.lt.s32.totalorder %v921, 500
          %vm938 = vcmp.lt.s32.totalorder %v922, 500
          %vm939 = vcmp.lt.s32.totalorder %v923, 500
          %vm940 = vcmp.lt.s32.totalorder %v924, 500
          %vm941 = vcmp.lt.s32.totalorder %v925, 500
          %vm942 = vcmp.lt.s32.totalorder %v926, 500
          %vm943 = vcmp.lt.s32.totalorder %v927, 500
          %vm944 = vcmp.lt.s32.totalorder %v928, 500
          %vm945 = vcmp.lt.s32.totalorder %v929, 500
          %vm946 = vcmp.lt.s32.totalorder %v930, 500
          %vm947 = vcmp.lt.s32.totalorder %v931, 500
          %vm948 = vcmp.lt.s32.totalorder %v932, 500
          %vm949 = vcmp.lt.s32.totalorder %v933, 500
          %vm950 = vcmp.lt.s32.totalorder %v934, 500
          %vm951 = vcmp.lt.s32.totalorder %v935, 500
          %v952 = vsel %vm936, %v840, 0.0
          %v953 = vsel %vm937, %v843, 0.0
          %v954 = vsel %vm938, %v848, 0.0
          %v955 = vsel %vm939, %v851, 0.0
          %v956 = vsel %vm940, %v856, 0.0
          %v957 = vsel %vm941, %v859, 0.0
          %v958 = vsel %vm942, %v864, 0.0
          %v959 = vsel %vm943, %v867, 0.0
          %v960 = vsel %vm944, %v872, 0.0
          %v961 = vsel %vm945, %v875, 0.0
          %v962 = vsel %vm946, %v880, 0.0
          %v963 = vsel %vm947, %v883, 0.0
          %v964 = vsel %vm948, %v888, 0.0
          %v965 = vsel %vm949, %v891, 0.0
          %v966 = vsel %vm950, %v896, 0.0
          %v967 = vsel %vm951, %v899, 0.0
          %v968 = vpack.c.bf16 %v953, %v952
          %v969 = vpack.c.bf16 %v955, %v954
          %v970 = vpack.c.bf16 %v957, %v956
          %v971 = vpack.c.bf16 %v959, %v958
          %v972 = vpack.c.bf16 %v961, %v960
          %v973 = vpack.c.bf16 %v963, %v962
          %v974 = vpack.c.bf16 %v965, %v964
          %v975 = vpack.c.bf16 %v967, %v966
          %v984 = vunpack.c.l.b16 %v968
          %v985 = vunpack.c.h.b16 %v968
          %v986 = vunpack.c.l.b16 %v969
          %v987 = vunpack.c.h.b16 %v969
          %v988 = vunpack.c.l.b16 %v970
          %v989 = vunpack.c.h.b16 %v970
          %v990 = vunpack.c.l.b16 %v971
          %v991 = vunpack.c.h.b16 %v971
          %v992 = vunpack.c.l.b16 %v972
          %v993 = vunpack.c.h.b16 %v972
          %v994 = vunpack.c.l.b16 %v973
          %v995 = vunpack.c.h.b16 %v973
          %v996 = vunpack.c.l.b16 %v974
          %v997 = vunpack.c.h.b16 %v974
          %v998 = vunpack.c.l.b16 %v975
          %v999 = vunpack.c.h.b16 %v975
          %v1000 = vpack.c.b16 %v984, %v984
          %v1001 = vpack.c.b16 %v985, %v985
          %v1002 = vpack.c.b16 %v986, %v986
          %v1003 = vpack.c.b16 %v987, %v987
          %v1004 = vpack.c.b16 %v988, %v988
          %v1005 = vpack.c.b16 %v989, %v989
          %v1006 = vpack.c.b16 %v990, %v990
          %v1007 = vpack.c.b16 %v991, %v991
          %v1008 = vpack.c.b16 %v992, %v992
          %v1009 = vpack.c.b16 %v993, %v993
          %v1010 = vpack.c.b16 %v994, %v994
          %v1011 = vpack.c.b16 %v995, %v995
          %v1012 = vpack.c.b16 %v996, %v996
          %v1013 = vpack.c.b16 %v997, %v997
          %v1014 = vpack.c.b16 %v998, %v998
          %v1015 = vpack.c.b16 %v999, %v999
          %1032 = vst [vmem:[%s403] sm:$0xf] %v1000
          %1033 = vst [vmem:[%s403 + $0x4] sm:$0xf] %v1001
          %1034 = vst [vmem:[%s403 + $0x8] sm:$0xf] %v1002
          %1035 = vst [vmem:[%s403 + $0xc] sm:$0xf] %v1003
          %1036 = vst [vmem:[%s403 + $0x10] sm:$0xf] %v1004
          %1037 = vst [vmem:[%s403 + $0x14] sm:$0xf] %v1005
          %1038 = vst [vmem:[%s403 + $0x18] sm:$0xf] %v1006
          %1039 = vst [vmem:[%s403 + $0x1c] sm:$0xf] %v1007
          %1040 = vst [vmem:[%s403 + $0x20] sm:$0xf] %v1008
          %1041 = vst [vmem:[%s403 + $0x24] sm:$0xf] %v1009
          %1042 = vst [vmem:[%s403 + $0x28] sm:$0xf] %v1010
          %1043 = vst [vmem:[%s403 + $0x2c] sm:$0xf] %v1011
          %1044 = vst [vmem:[%s403 + $0x30] sm:$0xf] %v1012
          %1045 = vst [vmem:[%s403 + $0x34] sm:$0xf] %v1013
          %1046 = vst [vmem:[%s403 + $0x38] sm:$0xf] %v1014
          %1047 = vst [vmem:[%s403 + $0x3c] sm:$0xf] %v1015
          %v1048 = vadd.f32 %v952, %v953
          %v1049 = vadd.f32 %v1048, %v954
          %v1050 = vadd.f32 %v1049, %v955
          %v1051 = vadd.f32 %v1050, %v956
          %v1052 = vadd.f32 %v1051, %v957
          %v1053 = vadd.f32 %v1052, %v958
          %v1054 = vadd.f32 %v1053, %v959
          %v1055 = vadd.f32 %v1054, %v960
          %v1056 = vadd.f32 %v1055, %v961
          %v1057 = vadd.f32 %v1056, %v962
          %v1058 = vadd.f32 %v1057, %v963
          %v1059 = vadd.f32 %v1058, %v964
          %v1060 = vadd.f32 %v1059, %v965
          %v1061 = vadd.f32 %v1060, %v966
          %v1062 = vadd.f32 %v1061, %v967
          %v1063 = vrot.slane %v1062, 4
          %v1064 = vadd.f32 %v1062, %v1063
          %v1065 = vrot.slane %v1064, 2
          %v1066 = vadd.f32 %v1064, %v1065
          %v1067 = vrot.slane %v1066, 1
          %v1068 = vadd.f32 %v1066, %v1067
          %1069 = vst [vmem:[%s407] sm:$0x1] %v1068
          %v1070 = vmul.f32 %v952, %v952
          %v1071 = vmul.f32 %v953, %v953
          %v1072 = vmul.f32 %v954, %v954
          %v1073 = vmul.f32 %v955, %v955
          %v1074 = vmul.f32 %v956, %v956
          %v1075 = vmul.f32 %v957, %v957
          %v1076 = vmul.f32 %v958, %v958
          %v1077 = vmul.f32 %v959, %v959
          %v1078 = vmul.f32 %v960, %v960
          %v1079 = vmul.f32 %v961, %v961
          %v1080 = vmul.f32 %v962, %v962
          %v1081 = vmul.f32 %v963, %v963
          %v1082 = vmul.f32 %v964, %v964
          %v1083 = vmul.f32 %v965, %v965
          %v1084 = vmul.f32 %v966, %v966
          %v1085 = vmul.f32 %v967, %v967
          %v1086 = vadd.f32 %v1070, %v1071
          %v1087 = vadd.f32 %v1086, %v1072
          %v1088 = vadd.f32 %v1087, %v1073
          %v1089 = vadd.f32 %v1088, %v1074
          %v1090 = vadd.f32 %v1089, %v1075
          %v1091 = vadd.f32 %v1090, %v1076
          %v1092 = vadd.f32 %v1091, %v1077
          %v1093 = vadd.f32 %v1092, %v1078
          %v1094 = vadd.f32 %v1093, %v1079
          %v1095 = vadd.f32 %v1094, %v1080
          %v1096 = vadd.f32 %v1095, %v1081
          %v1097 = vadd.f32 %v1096, %v1082
          %v1098 = vadd.f32 %v1097, %v1083
          %v1099 = vadd.f32 %v1098, %v1084
          %v1100 = vadd.f32 %v1099, %v1085
          %v1101 = vrot.slane %v1100, 4
          %v1102 = vadd.f32 %v1100, %v1101
          %v1103 = vrot.slane %v1102, 2
          %v1104 = vadd.f32 %v1102, %v1103
          %v1105 = vrot.slane %v1104, 1
          %v1106 = vadd.f32 %v1104, %v1105
          %1107 = vst [vmem:[%s410] sm:$0x1] %v1106
        $region85: #{irrelevant_learner_forward.2} parent=72 // pred_fallthru
          _
        %s1108 = smul.u32 16, %s22
        %p1109 = scmp.lt.s32.totalorder %s1108, 63
        %s1110 = scalar_select %p1109, %s1108, 63
        %s1111 = smul.addr %s1110, 4
        %s1112 = scalar_lea.vmem %s4, %s1111
        %p1113 = scmp.lt.s32.totalorder %s22, 3
        %s1114 = scalar_select %p1113, %s22, 3
        %s1115 = scalar_lea.vmem %s5, %s1114
        %p1116 = scmp.lt.s32.totalorder %s22, 3
        %s1117 = scalar_select %p1116, %s22, 3
        %s1118 = scalar_lea.vmem %s6, %s1117
        // Predicated region
        $region86: #{irrelevant_learner_forward.2} parent=72 // pred_check
          %p1119 = pneg %p144
        $region87: #{irrelevant_learner_forward.2} parent=72 // pred_check_branch
          %1121 = sbr.rel (%p1119) target = $region89
        $region88: #{irrelevant_learner_forward.2} parent=72 // pred_region
          %s1122 = smul.u32 16, %s22
        $region89: #{irrelevant_learner_forward.2} parent=72 // pred_fallthru
          _
        // Predicated region
        $region90: #{irrelevant_learner_forward.2} parent=72 // pred_check
          %p1123 = pneg %p170
        $region91: #{irrelevant_learner_forward.2} parent=72 // pred_check_branch
          %1125 = sbr.rel (%p1123) target = $region93
        $region92: #{irrelevant_learner_forward.2} parent=72 // pred_region
          _
        $region93: #{irrelevant_learner_forward.2} parent=72 // pred_fallthru
          _
        // Predicated region
        $region94: #{irrelevant_learner_forward.2} parent=72 // pred_check
          %p1126 = pneg %p196
        $region95: #{irrelevant_learner_forward.2} parent=72 // pred_check_branch
          %1128 = sbr.rel (%p1126) target = $region97
        $region96: #{irrelevant_learner_forward.2} parent=72 // pred_region
          _
        $region97: #{irrelevant_learner_forward.2} parent=72 // pred_fallthru
          _
      $region73: #{irrelevant_learner_forward.2} parent=5 // pred_fallthru
        _
      %p1129 = scmp.le.s32.totalorder 2, %s13
      // Predicated region
      $region98: #{irrelevant_learner_forward.2} parent=5 // pred_check
        %p1130 = pneg %p1129
      $region99: #{irrelevant_learner_forward.2} parent=5 // pred_check_branch
        %1132 = sbr.rel (%p1130) target = $region101
      $region100: #{irrelevant_learner_forward.2} parent=5 // pred_region
        %s1133 = ssub.s32 %s13, 2
        // Predicated region
        $region102: #{irrelevant_learner_forward.2} parent=100 // pred_check
          %p1134 = pneg %p150
        $region103: #{irrelevant_learner_forward.2} parent=100 // pred_check_branch
          %1136 = sbr.rel (%p1134) target = $region105
        $region104: #{irrelevant_learner_forward.2} parent=100 // pred_region
          %s1137 = smul.u32 16, %s24
          %p1138 = scmp.lt.s32.totalorder %s1137, 63
          %s1139 = scalar_select %p1138, %s1137, 63
          %s1140 = smul.addr %s1139, 4
          %s1141 = scalar_lea.vmem %s4, %s1140
        $region105: #{irrelevant_learner_forward.2} parent=100 // pred_fallthru
          _
        // Predicated region
        $region106: #{irrelevant_learner_forward.2} parent=100 // pred_check
          %p1142 = pneg %p176
        $region107: #{irrelevant_learner_forward.2} parent=100 // pred_check_branch
          %1144 = sbr.rel (%p1142) target = $region109
        $region108: #{irrelevant_learner_forward.2} parent=100 // pred_region
          %p1145 = scmp.lt.s32.totalorder %s24, 3
          %s1146 = scalar_select %p1145, %s24, 3
          %s1147 = scalar_lea.vmem %s5, %s1146
        $region109: #{irrelevant_learner_forward.2} parent=100 // pred_fallthru
          _
        // Predicated region
        $region110: #{irrelevant_learner_forward.2} parent=100 // pred_check
          %p1148 = pneg %p202
        $region111: #{irrelevant_learner_forward.2} parent=100 // pred_check_branch
          %1150 = sbr.rel (%p1148) target = $region113
        $region112: #{irrelevant_learner_forward.2} parent=100 // pred_region
          %p1151 = scmp.lt.s32.totalorder %s24, 3
          %s1152 = scalar_select %p1151, %s24, 3
          %s1153 = scalar_lea.vmem %s6, %s1152
        $region113: #{irrelevant_learner_forward.2} parent=100 // pred_fallthru
          _
      $region101: #{irrelevant_learner_forward.2} parent=5 // pred_fallthru
        _
    $region6: #{irrelevant_learner_forward.2} parent=1 // loop_footer
      %s17 = sadd.s32 1, %s13
    $region7: #{irrelevant_learner_forward.2} parent=1 // loop_footer_branch
      %12 = sbr.rel target = $region3
    $region8: #{irrelevant_learner_forward.2} parent=1 // loop_exit
      _

</llo_original>
